<compile_context>
chip_gen: v5e
topology: v5e:2x2
jax: 0.10.0
libtpu: 0.0.40
codegen_flags: <defaults>
</compile_context>

<pallas_src>
import functools

import jax
import jax.numpy as jnp
from jax.experimental import pallas as pl
from jax.experimental.pallas import tpu as pltpu

EPS = 1e-5
GROUPS = 2


def _gn_relu_block(y, gamma, beta, groups):
    """GroupNorm(groups) + affine + ReLU for ONE sample slab.

    y: (C, P) f32, gamma/beta: (C, 1) f32.  Single-pass E[x]/E[x^2] stats.
    # TODO(synk): switch to a two-pass/Welford form if tolerances ever tighten.
    """
    c, p = y.shape
    cg = c // groups
    inv_n = 1.0 / float(cg * p)
    pieces = []
    for g in range(groups):                       # static sublane slices
        h = y[g * cg:(g + 1) * cg, :]
        mu = jnp.sum(h) * inv_n
        var = jnp.maximum(jnp.sum(h * h) * inv_n - mu * mu, 0.0)
        pieces.append((h - mu) * jax.lax.rsqrt(var + EPS))
    yn = pieces[0] if groups == 1 else jnp.concatenate(pieces, axis=0)
    return jnp.maximum(yn * gamma + beta, 0.0)


def fire_kernel(x_ref, w_sq_ref, p_sq_ref, w_ex_ref, p_ex_ref, o_ref,
                *, H, W, B, Cs, Ch, window_bf16):
    P = H * W
    BP = B * P

    # ---------- squeeze: 1x1 conv over all B samples in one matmul ----------
    x_bf = x_ref[...].astype(jnp.bfloat16)                         # (Cin, B*P)
    p_sq = p_sq_ref[...]                                           # (Cs, 3)
    b_sq, g_sq, bt_sq = p_sq[:, 0:1], p_sq[:, 1:2], p_sq[:, 2:3]
    sq = jnp.dot(w_sq_ref[...], x_bf,
                 preferred_element_type=jnp.float32) + b_sq        # (Cs, B*P) f32

    # per-sample GroupNorm(2) + ReLU (static lane slices at multiples of P)
    sq_parts = [_gn_relu_block(sq[:, b * P:(b + 1) * P], g_sq, bt_sq, GROUPS)
                for b in range(B)]
    sq_act = sq_parts[0] if B == 1 else jnp.concatenate(sq_parts, axis=1)

    # ------- fused expand (1x1 + 3x3, padding=1) as ONE im2col matmul -------
    src = sq_act.astype(jnp.bfloat16) if window_bf16 else sq_act

    pad = W + 1                                   # covers the +-(W+1) lane shifts
    zeros = jnp.zeros((Cs, pad), src.dtype)
    padded = jnp.concatenate([zeros, src, zeros], axis=1)          # (Cs, B*P + 2*pad)

    lane = jax.lax.broadcasted_iota(jnp.int32, (1, BP), 1)
    xw = lane % W
    m_left, m_right = xw > 0, xw < (W - 1)
    if B > 1:                                     # row masks only needed across samples
        yh = (lane // W) % H
        m_top, m_bot = yh > 0, yh < (H - 1)

    wins = []
    for ky in range(3):
        for kx in range(3):
            s = (ky - 1) * W + (kx - 1)
            win = padded[:, pad + s: pad + s + BP]                 # (Cs, B*P)
            mask = None
            if kx == 0:
                mask = m_left
            elif kx == 2:
                mask = m_right
            if B > 1:
                if ky == 0:
                    mask = m_top if mask is None else jnp.logical_and(mask, m_top)
                elif ky == 2:
                    mask = m_bot if mask is None else jnp.logical_and(mask, m_bot)
            if mask is not None:
                win = jnp.where(mask, win, jnp.zeros_like(win))
            wins.append(win)
    win_all = jnp.concatenate(wins, axis=0)                        # (9*Cs, B*P)
    if win_all.dtype != jnp.bfloat16:
        win_all = win_all.astype(jnp.bfloat16)

    p_ex = p_ex_ref[...]                                           # (2*Ch, 3)
    b_ex, g_ex, bt_ex = p_ex[:, 0:1], p_ex[:, 1:2], p_ex[:, 2:3]
    ex = jnp.dot(w_ex_ref[...], win_all,
                 preferred_element_type=jnp.float32) + b_ex        # (2*Ch, B*P) f32

    # GroupNorm(2) on each concat half == 4 groups over the 2*Ch rows; ReLU;
    # per-sample lane-dense store (offsets are multiples of P = k*128).
    for b in range(B):
        out_b = _gn_relu_block(ex[:, b * P:(b + 1) * P], g_ex, bt_ex, 2 * GROUPS)
        o_ref[:, b * P:(b + 1) * P] = out_b.astype(o_ref.dtype)


def _window_compute_in_bf16():
    # v5e has no native bf16 VPU: keep window/mask math in f32 there and cast
    # once before the MXU dot.  v6e/v7x (and CPU interpret) use bf16.
    try:
        kind = jax.devices()[0].device_kind.lower()
    except Exception:
        return True
    return "v5" not in kind


def _pick_block_batch(N, Cin, Cs, Ch, P, vmem_budget_bytes=8 << 20):
    """Samples per grid step: amortize per-step overhead, but keep >= 2
    'parallel' grid steps (v7x has 2 TensorCores) and stay within a VMEM
    budget sized for v7x's smaller (64 MiB physical / 32 MiB scoped) VMEM."""
    per_sample = 4 * P * (2 * Cin + 4 * Ch + Cs + 9 * Cs + 2 * Ch)  # rough f32 working set
    max_b = max(1, vmem_budget_bytes // per_sample)
    target = int(min(max_b, max(1, N // 2)))
    for b in range(target, 0, -1):
        if N % b == 0:
            return b
    return 1


def prepare_fire_params(params):
    """One-time weight/param preprocessing (hoisted out of the per-call path)."""
    Cin, Cs = params["w_sq"].shape
    Ch = params["w_e1"].shape[1]
    f32, bf = jnp.float32, jnp.bfloat16

    w_sq = params["w_sq"].T.astype(bf)                                   # (Cs, Cin)

    # Fused expand weight: rows [0,Ch) = w_e1 in the centre (ky=1,kx=1) column
    # block, rows [Ch,2Ch) = w_e3 flattened as [(ky,kx) outer, ci inner].
    w_e1_t = params["w_e1"].T.astype(f32)                                # (Ch, Cs)
    w_e3_t = jnp.transpose(params["w_e3"], (3, 0, 1, 2)).reshape(Ch, 9 * Cs).astype(f32)
    w_top = jnp.zeros((Ch, 9 * Cs), f32).at[:, 4 * Cs:5 * Cs].set(w_e1_t)
    w_ex = jnp.concatenate([w_top, w_e3_t], axis=0).astype(bf)           # (2*Ch, 9*Cs)

    def pack(b, g, bt):          # -> (C, 3) f32: columns [bias, gamma, beta]
        return jnp.stack([b.reshape(-1), g.reshape(-1), bt.reshape(-1)], axis=1).astype(f32)

    p_sq = pack(params["b_sq"], params["g_sq"], params["bt_sq"])          # (Cs, 3)
    p_ex = jnp.concatenate(
        [pack(params["b_e1"], params["g_e1"], params["bt_e1"]),
         pack(params["b_e3"], params["g_e3"], params["bt_e3"])], axis=0)  # (2*Ch, 3)

    return {"w_sq": w_sq, "p_sq": p_sq, "w_ex": w_ex, "p_ex": p_ex}


def fire_pallas(x_nchw, prep):
    """x_nchw: (N, Cin, H, W) float32 -> (N, 2*Ch, H, W) float32."""
    N, Cin, H, W = x_nchw.shape
    P = H * W
    assert P % 128 == 0, "H*W must be a multiple of 128 for the lane-dense layout"

    w_sq, p_sq, w_ex, p_ex = prep["w_sq"], prep["p_sq"], prep["w_ex"], prep["p_ex"]
    Cs = w_sq.shape[0]
    Co = w_ex.shape[0]                      # 2*Ch (concat order)
    Ch = Co // 2
    assert w_sq.shape[1] == Cin

    B = _pick_block_batch(N, Cin, Cs, Ch, P)
    steps = N // B
    BP = B * P

    # Layout plumbing (tiny): channels on sublanes, (sample, spatial) on lanes.
    # x stays f32 here; the bf16 cast happens inside the kernel (less HBM traffic).
    x_cl = jnp.transpose(x_nchw.reshape(N, Cin, P), (1, 0, 2)).reshape(Cin, N * P)

    kernel = functools.partial(fire_kernel, H=H, W=W, B=B, Cs=Cs, Ch=Ch,
                               window_bf16=_window_compute_in_bf16())

    flops = 2 * N * P * (Cin * Cs + Cs * Ch + 9 * Cs * Ch)
    bytes_accessed = (int(x_cl.size) * 4 + N * Co * P * 4
                      + int(w_sq.size) * 2 + int(w_ex.size) * 2
                      + (int(p_sq.size) + int(p_ex.size)) * 4)

    def rep(shape):              # replicated (weights/params) block spec
        nd = len(shape)
        return pl.BlockSpec(shape, lambda n, _nd=nd: (0,) * _nd)

    out_flat = pl.pallas_call(
        kernel,
        out_shape=jax.ShapeDtypeStruct((Co, N * P), jnp.float32),
        grid=(steps,),
        in_specs=[
            pl.BlockSpec((Cin, BP), lambda n: (0, n)),
            rep((Cs, Cin)), rep((Cs, 3)),
            rep((Co, 9 * Cs)), rep((Co, 3)),
        ],
        out_specs=pl.BlockSpec((Co, BP), lambda n: (0, n)),
        compiler_params=pltpu.CompilerParams(dimension_semantics=("parallel",)),
        cost_estimate=pl.CostEstimate(flops=flops, transcendentals=6 * N,
                                      bytes_accessed=bytes_accessed),
    )(x_cl, w_sq, p_sq, w_ex, p_ex)

    return jnp.transpose(out_flat.reshape(Co, N, H, W), (1, 0, 2, 3))


def fire_reference(x_nchw, params):
    """Pure-JAX f32 reference mirroring the PyTorch Fire forward (for verification)."""
    x = jnp.transpose(x_nchw, (0, 2, 3, 1))  # NHWC
    N, H, W, _ = x.shape

    def gn_relu(y, gamma, beta):
        n, h, w, c = y.shape
        yg = y.reshape(n, h, w, GROUPS, c // GROUPS)
        mean = yg.mean(axis=(1, 2, 4), keepdims=True)
        var = ((yg - mean) ** 2).mean(axis=(1, 2, 4), keepdims=True)
        yn = ((yg - mean) / jnp.sqrt(var + EPS)).reshape(n, h, w, c)
        return jnp.maximum(yn * gamma + beta, 0.0)

    sq = jnp.einsum("nhwc,cd->nhwd", x, params["w_sq"]) + params["b_sq"]
    sq = gn_relu(sq, params["g_sq"], params["bt_sq"])

    e1 = jnp.einsum("nhwc,cd->nhwd", sq, params["w_e1"]) + params["b_e1"]
    e1 = gn_relu(e1, params["g_e1"], params["bt_e1"])

    padded = jnp.pad(sq, ((0, 0), (1, 1), (1, 1), (0, 0)))
    acc = 0.0
    for ky in range(3):
        for kx in range(3):
            acc = acc + jnp.einsum("nhwc,cd->nhwd",
                                   padded[:, ky:ky + H, kx:kx + W, :],
                                   params["w_e3"][ky, kx])
    e3 = gn_relu(acc + params["b_e3"], params["g_e3"], params["bt_e3"])

    out = jnp.concatenate([e1, e3], axis=-1)
    return jnp.transpose(out, (0, 3, 1, 2))  # NCHW


def init_params(key, in_channel, out_channel, squeeze_channel):
    Ch = out_channel // 2
    ks = jax.random.split(key, 12)
    f32 = jnp.float32
    return {
        # squeeze 1x1
        "w_sq": 0.2 * jax.random.normal(ks[0], (in_channel, squeeze_channel), f32),
        "b_sq": 0.1 * jax.random.normal(ks[1], (1, squeeze_channel), f32),
        "g_sq": 1.0 + 0.1 * jax.random.normal(ks[2], (1, squeeze_channel), f32),
        "bt_sq": 0.1 * jax.random.normal(ks[3], (1, squeeze_channel), f32),
        # expand 1x1
        "w_e1": 0.2 * jax.random.normal(ks[4], (squeeze_channel, Ch), f32),
        "b_e1": 0.1 * jax.random.normal(ks[5], (1, Ch), f32),
        "g_e1": 1.0 + 0.1 * jax.random.normal(ks[6], (1, Ch), f32),
        "bt_e1": 0.1 * jax.random.normal(ks[7], (1, Ch), f32),
        # expand 3x3
        "w_e3": 0.2 * jax.random.normal(ks[8], (3, 3, squeeze_channel, Ch), f32),
        "b_e3": 0.1 * jax.random.normal(ks[9], (1, Ch), f32),
        "g_e3": 1.0 + 0.1 * jax.random.normal(ks[10], (1, Ch), f32),
        "bt_e3": 0.1 * jax.random.normal(ks[11], (1, Ch), f32),
    }


if __name__ == "__main__":
    key = jax.random.PRNGKey(0)
    k_x, k_x2, k_p = jax.random.split(key, 3)

    N, Cin, H, W = 2, 4, 16, 16
    squeeze_channel, out_channel = 8, 32

    params = init_params(k_p, Cin, out_channel, squeeze_channel)
    prep = prepare_fire_params(params)            # one-time param preprocessing
    fire_fn = jax.jit(fire_pallas)

    # Main check: N=2 -> B=1, grid=(2,) so both v7x TensorCores get a step.
    x = jax.random.normal(k_x, (N, Cin, H, W), jnp.float32)  # NCHW like PyTorch
    out = jax.block_until_ready(fire_fn(x, prep))
    ref = fire_reference(x, params)
    assert out.shape == (N, out_channel, H, W)
    # Tolerance loosened vs the f32 reference because matmul operands are bf16.
    assert jnp.allclose(out, ref, atol=5e-2, rtol=5e-2), float(jnp.max(jnp.abs(out - ref)))

    # Also exercise the B>1 (multi-sample-per-grid-step) path: N=4 -> B=2, grid=(2,).
    x2 = jax.random.normal(k_x2, (4, Cin, H, W), jnp.float32)
    out2 = jax.block_until_ready(fire_fn(x2, prep))
    ref2 = fire_reference(x2, params)
    assert jnp.allclose(out2, ref2, atol=5e-2, rtol=5e-2), float(jnp.max(jnp.abs(out2 - ref2)))

    print("KERNEL_OK")
</pallas_src>

<mosaic_0001>
module attributes {stable_mosaic.version = 11 : i64} {
  func.func @fire_kernel(%arg0: i32, %arg1: memref<4x256xf32, #tpu.memory_space<vmem>>, %arg2: memref<8x4xbf16, #tpu.memory_space<vmem>>, %arg3: memref<8x3xf32, #tpu.memory_space<vmem>>, %arg4: memref<32x72xbf16, #tpu.memory_space<vmem>>, %arg5: memref<32x3xf32, #tpu.memory_space<vmem>>, %arg6: memref<32x256xf32, #tpu.memory_space<vmem>>) attributes {dimension_semantics = [#tpu.dimension_semantics<parallel>], iteration_bounds = array<i64: 2>, scalar_prefetch = 0 : i64, scratch_operands = 0 : i64, tpu.core_type = #tpu.core_type<tc>, window_params = [{transform_indices = @transform_0, window_bounds = array<i64: 4, 256>}, {pipeline_mode = #tpu.pipeline_mode<synchronous>, transform_indices = @transform_1, window_bounds = array<i64: 8, 4>}, {pipeline_mode = #tpu.pipeline_mode<synchronous>, transform_indices = @transform_2, window_bounds = array<i64: 8, 3>}, {pipeline_mode = #tpu.pipeline_mode<synchronous>, transform_indices = @transform_3, window_bounds = array<i64: 32, 72>}, {pipeline_mode = #tpu.pipeline_mode<synchronous>, transform_indices = @transform_4, window_bounds = array<i64: 32, 3>}, {transform_indices = @transform_5, window_bounds = array<i64: 32, 256>}]} {
    %c0 = arith.constant 0 : index
    %c0_0 = arith.constant 0 : index
    %0 = vector.load %arg1[%c0, %c0_0] : memref<4x256xf32, #tpu.memory_space<vmem>>, vector<4x256xf32>
    %1 = arith.truncf %0 : vector<4x256xf32> to vector<4x256xbf16>
    %c0_1 = arith.constant 0 : index
    %c0_2 = arith.constant 0 : index
    %2 = vector.load %arg3[%c0_1, %c0_2] : memref<8x3xf32, #tpu.memory_space<vmem>>, vector<8x3xf32>
    %3 = vector.extract_strided_slice %2 {offsets = [0, 0], sizes = [8, 1], strides = [1, 1]} : vector<8x3xf32> to vector<8x1xf32>
    %4 = vector.extract_strided_slice %2 {offsets = [0, 1], sizes = [8, 1], strides = [1, 1]} : vector<8x3xf32> to vector<8x1xf32>
    %5 = vector.extract_strided_slice %2 {offsets = [0, 2], sizes = [8, 1], strides = [1, 1]} : vector<8x3xf32> to vector<8x1xf32>
    %c0_3 = arith.constant 0 : index
    %c0_4 = arith.constant 0 : index
    %6 = vector.load %arg2[%c0_3, %c0_4] : memref<8x4xbf16, #tpu.memory_space<vmem>>, vector<8x4xbf16>
    %cst = arith.constant dense<0.000000e+00> : vector<8x256xf32>
    %7 = tpu.matmul %6, %1, %cst {dimension_numbers = #tpu.dot_dimension_numbers<[1], [0], [0], [1], [0, 0, 1, 1], [], []>} : vector<8x4xbf16>, vector<4x256xbf16>, vector<8x256xf32> -> vector<8x256xf32>
    %8 = vector.broadcast %3 : vector<8x1xf32> to vector<8x256xf32>
    %9 = arith.addf %7, %8 : vector<8x256xf32>
    %10 = vector.extract_strided_slice %9 {offsets = [0, 0], sizes = [4, 256], strides = [1, 1]} : vector<8x256xf32> to vector<4x256xf32>
    %11 = vector.shape_cast %10 : vector<4x256xf32> to vector<1x4x256xf32>
    %cst_5 = arith.constant dense<0.000000e+00> : vector<1xf32>
    %12 = vector.multi_reduction <add>, %11, %cst_5 [1, 2] : vector<1x4x256xf32> to vector<1xf32>
    %13 = vector.shape_cast %12 : vector<1xf32> to vector<1x1x1xf32>
    %14 = vector.extract %13[0, 0, 0] : f32 from vector<1x1x1xf32>
    %cst_6 = arith.constant 9.765625E-4 : f32
    %15 = arith.mulf %14, %cst_6 : f32
    %16 = arith.mulf %10, %10 : vector<4x256xf32>
    %17 = vector.shape_cast %16 : vector<4x256xf32> to vector<1x4x256xf32>
    %cst_7 = arith.constant dense<0.000000e+00> : vector<1xf32>
    %18 = vector.multi_reduction <add>, %17, %cst_7 [1, 2] : vector<1x4x256xf32> to vector<1xf32>
    %19 = vector.shape_cast %18 : vector<1xf32> to vector<1x1x1xf32>
    %20 = vector.extract %19[0, 0, 0] : f32 from vector<1x1x1xf32>
    %cst_8 = arith.constant 9.765625E-4 : f32
    %21 = arith.mulf %20, %cst_8 : f32
    %22 = arith.mulf %15, %15 : f32
    %23 = arith.subf %21, %22 : f32
    %cst_9 = arith.constant 0.000000e+00 : f32
    %24 = arith.maximumf %23, %cst_9 : f32
    %25 = vector.broadcast %15 : f32 to vector<4x256xf32>
    %26 = arith.subf %10, %25 : vector<4x256xf32>
    %cst_10 = arith.constant 9.99999974E-6 : f32
    %27 = arith.addf %24, %cst_10 : f32
    %28 = math.rsqrt %27 : f32
    %29 = vector.broadcast %28 : f32 to vector<4x256xf32>
    %30 = arith.mulf %26, %29 : vector<4x256xf32>
    %31 = vector.extract_strided_slice %9 {offsets = [4, 0], sizes = [4, 256], strides = [1, 1]} : vector<8x256xf32> to vector<4x256xf32>
    %32 = vector.shape_cast %31 : vector<4x256xf32> to vector<1x4x256xf32>
    %cst_11 = arith.constant dense<0.000000e+00> : vector<1xf32>
    %33 = vector.multi_reduction <add>, %32, %cst_11 [1, 2] : vector<1x4x256xf32> to vector<1xf32>
    %34 = vector.shape_cast %33 : vector<1xf32> to vector<1x1x1xf32>
    %35 = vector.extract %34[0, 0, 0] : f32 from vector<1x1x1xf32>
    %cst_12 = arith.constant 9.765625E-4 : f32
    %36 = arith.mulf %35, %cst_12 : f32
    %37 = arith.mulf %31, %31 : vector<4x256xf32>
    %38 = vector.shape_cast %37 : vector<4x256xf32> to vector<1x4x256xf32>
    %cst_13 = arith.constant dense<0.000000e+00> : vector<1xf32>
    %39 = vector.multi_reduction <add>, %38, %cst_13 [1, 2] : vector<1x4x256xf32> to vector<1xf32>
    %40 = vector.shape_cast %39 : vector<1xf32> to vector<1x1x1xf32>
    %41 = vector.extract %40[0, 0, 0] : f32 from vector<1x1x1xf32>
    %cst_14 = arith.constant 9.765625E-4 : f32
    %42 = arith.mulf %41, %cst_14 : f32
    %43 = arith.mulf %36, %36 : f32
    %44 = arith.subf %42, %43 : f32
    %cst_15 = arith.constant 0.000000e+00 : f32
    %45 = arith.maximumf %44, %cst_15 : f32
    %46 = vector.broadcast %36 : f32 to vector<4x256xf32>
    %47 = arith.subf %31, %46 : vector<4x256xf32>
    %cst_16 = arith.constant 9.99999974E-6 : f32
    %48 = arith.addf %45, %cst_16 : f32
    %49 = math.rsqrt %48 : f32
    %50 = vector.broadcast %49 : f32 to vector<4x256xf32>
    %51 = arith.mulf %47, %50 : vector<4x256xf32>
    %52 = tpu.concatenate %30, %51 in 0 : vector<4x256xf32>, vector<4x256xf32> -> vector<8x256xf32>
    %53 = vector.broadcast %4 : vector<8x1xf32> to vector<8x256xf32>
    %54 = arith.mulf %52, %53 : vector<8x256xf32>
    %55 = vector.broadcast %5 : vector<8x1xf32> to vector<8x256xf32>
    %56 = arith.addf %54, %55 : vector<8x256xf32>
    %cst_17 = arith.constant 0.000000e+00 : f32
    %57 = vector.broadcast %cst_17 : f32 to vector<8x256xf32>
    %58 = arith.maximumf %56, %57 : vector<8x256xf32>
    %59 = arith.truncf %58 : vector<8x256xf32> to vector<8x256xbf16>
    %cst_18 = arith.constant 0.000000e+00 : bf16
    %60 = vector.broadcast %cst_18 : bf16 to vector<8x17xbf16>
    %61 = tpu.concatenate %60, %59, %60 in 1 : vector<8x17xbf16>, vector<8x256xbf16>, vector<8x17xbf16> -> vector<8x290xbf16>
    %62 = tpu.iota {dimensions = array<i32: 1>} : vector<1x256xi32>
    %c16_i32 = arith.constant 16 : i32
    %c0_i32 = arith.constant 0 : i32
    %63 = arith.cmpi eq, %c16_i32, %c0_i32 : i32
    %c1_i32 = arith.constant 1 : i32
    %64 = arith.select %63, %c1_i32, %c16_i32 : i32
    %65 = vector.broadcast %64 : i32 to vector<1x256xi32>
    %66 = arith.remsi %62, %65 : vector<1x256xi32>
    %c0_i32_19 = arith.constant 0 : i32
    %67 = vector.broadcast %c0_i32_19 : i32 to vector<1x256xi32>
    %68 = arith.cmpi ne, %66, %67 : vector<1x256xi32>
    %c0_i32_20 = arith.constant 0 : i32
    %69 = vector.broadcast %c0_i32_20 : i32 to vector<1x256xi32>
    %70 = arith.cmpi slt, %66, %69 : vector<1x256xi32>
    %c0_i32_21 = arith.constant 0 : i32
    %71 = arith.cmpi slt, %64, %c0_i32_21 : i32
    %72 = vector.broadcast %71 : i1 to vector<1x256xi1>
    %73 = vector.broadcast %72 : vector<1x256xi1> to vector<1x256xi1>
    %74 = arith.xori %70, %73 : vector<1x256xi1>
    %75 = arith.andi %74, %68 : vector<1x256xi1>
    %76 = vector.broadcast %64 : i32 to vector<1x256xi32>
    %77 = arith.addi %66, %76 : vector<1x256xi32>
    %78 = arith.select %75, %77, %66 : vector<1x256xi1>, vector<1x256xi32>
    %c0_i32_22 = arith.constant 0 : i32
    %79 = vector.broadcast %c0_i32_22 : i32 to vector<1x256xi32>
    %80 = arith.cmpi sgt, %78, %79 : vector<1x256xi32>
    %c15_i32 = arith.constant 15 : i32
    %81 = vector.broadcast %c15_i32 : i32 to vector<1x256xi32>
    %82 = arith.cmpi slt, %78, %81 : vector<1x256xi32>
    %83 = vector.extract_strided_slice %61 {offsets = [0, 0], sizes = [8, 256], strides = [1, 1]} : vector<8x290xbf16> to vector<8x256xbf16>
    %cst_23 = arith.constant 0.000000e+00 : bf16
    %84 = vector.broadcast %cst_23 : bf16 to vector<8x256xbf16>
    %85 = vector.shape_cast %80 : vector<1x256xi1> to vector<1x256xi1>
    %86 = vector.broadcast %85 : vector<1x256xi1> to vector<8x256xi1>
    %87 = arith.select %86, %83, %84 : vector<8x256xi1>, vector<8x256xbf16>
    %88 = vector.extract_strided_slice %61 {offsets = [0, 1], sizes = [8, 256], strides = [1, 1]} : vector<8x290xbf16> to vector<8x256xbf16>
    %89 = vector.extract_strided_slice %61 {offsets = [0, 2], sizes = [8, 256], strides = [1, 1]} : vector<8x290xbf16> to vector<8x256xbf16>
    %cst_24 = arith.constant 0.000000e+00 : bf16
    %90 = vector.broadcast %cst_24 : bf16 to vector<8x256xbf16>
    %91 = vector.shape_cast %82 : vector<1x256xi1> to vector<1x256xi1>
    %92 = vector.broadcast %91 : vector<1x256xi1> to vector<8x256xi1>
    %93 = arith.select %92, %89, %90 : vector<8x256xi1>, vector<8x256xbf16>
    %94 = vector.extract_strided_slice %61 {offsets = [0, 16], sizes = [8, 256], strides = [1, 1]} : vector<8x290xbf16> to vector<8x256xbf16>
    %cst_25 = arith.constant 0.000000e+00 : bf16
    %95 = vector.broadcast %cst_25 : bf16 to vector<8x256xbf16>
    %96 = vector.shape_cast %80 : vector<1x256xi1> to vector<1x256xi1>
    %97 = vector.broadcast %96 : vector<1x256xi1> to vector<8x256xi1>
    %98 = arith.select %97, %94, %95 : vector<8x256xi1>, vector<8x256xbf16>
    %99 = vector.extract_strided_slice %61 {offsets = [0, 17], sizes = [8, 256], strides = [1, 1]} : vector<8x290xbf16> to vector<8x256xbf16>
    %100 = vector.extract_strided_slice %61 {offsets = [0, 18], sizes = [8, 256], strides = [1, 1]} : vector<8x290xbf16> to vector<8x256xbf16>
    %cst_26 = arith.constant 0.000000e+00 : bf16
    %101 = vector.broadcast %cst_26 : bf16 to vector<8x256xbf16>
    %102 = vector.shape_cast %82 : vector<1x256xi1> to vector<1x256xi1>
    %103 = vector.broadcast %102 : vector<1x256xi1> to vector<8x256xi1>
    %104 = arith.select %103, %100, %101 : vector<8x256xi1>, vector<8x256xbf16>
    %105 = vector.extract_strided_slice %61 {offsets = [0, 32], sizes = [8, 256], strides = [1, 1]} : vector<8x290xbf16> to vector<8x256xbf16>
    %cst_27 = arith.constant 0.000000e+00 : bf16
    %106 = vector.broadcast %cst_27 : bf16 to vector<8x256xbf16>
    %107 = vector.shape_cast %80 : vector<1x256xi1> to vector<1x256xi1>
    %108 = vector.broadcast %107 : vector<1x256xi1> to vector<8x256xi1>
    %109 = arith.select %108, %105, %106 : vector<8x256xi1>, vector<8x256xbf16>
    %110 = vector.extract_strided_slice %61 {offsets = [0, 33], sizes = [8, 256], strides = [1, 1]} : vector<8x290xbf16> to vector<8x256xbf16>
    %111 = vector.extract_strided_slice %61 {offsets = [0, 34], sizes = [8, 256], strides = [1, 1]} : vector<8x290xbf16> to vector<8x256xbf16>
    %cst_28 = arith.constant 0.000000e+00 : bf16
    %112 = vector.broadcast %cst_28 : bf16 to vector<8x256xbf16>
    %113 = vector.shape_cast %82 : vector<1x256xi1> to vector<1x256xi1>
    %114 = vector.broadcast %113 : vector<1x256xi1> to vector<8x256xi1>
    %115 = arith.select %114, %111, %112 : vector<8x256xi1>, vector<8x256xbf16>
    %116 = tpu.concatenate %87, %88, %93, %98, %99, %104, %109, %110, %115 in 0 : vector<8x256xbf16>, vector<8x256xbf16>, vector<8x256xbf16>, vector<8x256xbf16>, vector<8x256xbf16>, vector<8x256xbf16>, vector<8x256xbf16>, vector<8x256xbf16>, vector<8x256xbf16> -> vector<72x256xbf16>
    %c0_29 = arith.constant 0 : index
    %c0_30 = arith.constant 0 : index
    %117 = vector.load %arg5[%c0_29, %c0_30] : memref<32x3xf32, #tpu.memory_space<vmem>>, vector<32x3xf32>
    %118 = vector.extract_strided_slice %117 {offsets = [0, 0], sizes = [32, 1], strides = [1, 1]} : vector<32x3xf32> to vector<32x1xf32>
    %119 = vector.extract_strided_slice %117 {offsets = [0, 1], sizes = [32, 1], strides = [1, 1]} : vector<32x3xf32> to vector<32x1xf32>
    %120 = vector.extract_strided_slice %117 {offsets = [0, 2], sizes = [32, 1], strides = [1, 1]} : vector<32x3xf32> to vector<32x1xf32>
    %c0_31 = arith.constant 0 : index
    %c0_32 = arith.constant 0 : index
    %121 = vector.load %arg4[%c0_31, %c0_32] : memref<32x72xbf16, #tpu.memory_space<vmem>>, vector<32x72xbf16>
    %cst_33 = arith.constant dense<0.000000e+00> : vector<32x256xf32>
    %122 = tpu.matmul %121, %116, %cst_33 {dimension_numbers = #tpu.dot_dimension_numbers<[1], [0], [0], [1], [0, 0, 1, 1], [], []>} : vector<32x72xbf16>, vector<72x256xbf16>, vector<32x256xf32> -> vector<32x256xf32>
    %123 = vector.broadcast %118 : vector<32x1xf32> to vector<32x256xf32>
    %124 = arith.addf %122, %123 : vector<32x256xf32>
    %125 = vector.extract_strided_slice %124 {offsets = [0, 0], sizes = [8, 256], strides = [1, 1]} : vector<32x256xf32> to vector<8x256xf32>
    %126 = vector.shape_cast %125 : vector<8x256xf32> to vector<1x8x256xf32>
    %cst_34 = arith.constant dense<0.000000e+00> : vector<1xf32>
    %127 = vector.multi_reduction <add>, %126, %cst_34 [1, 2] : vector<1x8x256xf32> to vector<1xf32>
    %128 = vector.shape_cast %127 : vector<1xf32> to vector<1x1x1xf32>
    %129 = vector.extract %128[0, 0, 0] : f32 from vector<1x1x1xf32>
    %cst_35 = arith.constant 4.8828125E-4 : f32
    %130 = arith.mulf %129, %cst_35 : f32
    %131 = arith.mulf %125, %125 : vector<8x256xf32>
    %132 = vector.shape_cast %131 : vector<8x256xf32> to vector<1x8x256xf32>
    %cst_36 = arith.constant dense<0.000000e+00> : vector<1xf32>
    %133 = vector.multi_reduction <add>, %132, %cst_36 [1, 2] : vector<1x8x256xf32> to vector<1xf32>
    %134 = vector.shape_cast %133 : vector<1xf32> to vector<1x1x1xf32>
    %135 = vector.extract %134[0, 0, 0] : f32 from vector<1x1x1xf32>
    %cst_37 = arith.constant 4.8828125E-4 : f32
    %136 = arith.mulf %135, %cst_37 : f32
    %137 = arith.mulf %130, %130 : f32
    %138 = arith.subf %136, %137 : f32
    %cst_38 = arith.constant 0.000000e+00 : f32
    %139 = arith.maximumf %138, %cst_38 : f32
    %140 = vector.broadcast %130 : f32 to vector<8x256xf32>
    %141 = arith.subf %125, %140 : vector<8x256xf32>
    %cst_39 = arith.constant 9.99999974E-6 : f32
    %142 = arith.addf %139, %cst_39 : f32
    %143 = math.rsqrt %142 : f32
    %144 = vector.broadcast %143 : f32 to vector<8x256xf32>
    %145 = arith.mulf %141, %144 : vector<8x256xf32>
    %146 = vector.extract_strided_slice %124 {offsets = [8, 0], sizes = [8, 256], strides = [1, 1]} : vector<32x256xf32> to vector<8x256xf32>
    %147 = vector.shape_cast %146 : vector<8x256xf32> to vector<1x8x256xf32>
    %cst_40 = arith.constant dense<0.000000e+00> : vector<1xf32>
    %148 = vector.multi_reduction <add>, %147, %cst_40 [1, 2] : vector<1x8x256xf32> to vector<1xf32>
    %149 = vector.shape_cast %148 : vector<1xf32> to vector<1x1x1xf32>
    %150 = vector.extract %149[0, 0, 0] : f32 from vector<1x1x1xf32>
    %cst_41 = arith.constant 4.8828125E-4 : f32
    %151 = arith.mulf %150, %cst_41 : f32
    %152 = arith.mulf %146, %146 : vector<8x256xf32>
    %153 = vector.shape_cast %152 : vector<8x256xf32> to vector<1x8x256xf32>
    %cst_42 = arith.constant dense<0.000000e+00> : vector<1xf32>
    %154 = vector.multi_reduction <add>, %153, %cst_42 [1, 2] : vector<1x8x256xf32> to vector<1xf32>
    %155 = vector.shape_cast %154 : vector<1xf32> to vector<1x1x1xf32>
    %156 = vector.extract %155[0, 0, 0] : f32 from vector<1x1x1xf32>
    %cst_43 = arith.constant 4.8828125E-4 : f32
    %157 = arith.mulf %156, %cst_43 : f32
    %158 = arith.mulf %151, %151 : f32
    %159 = arith.subf %157, %158 : f32
    %cst_44 = arith.constant 0.000000e+00 : f32
    %160 = arith.maximumf %159, %cst_44 : f32
    %161 = vector.broadcast %151 : f32 to vector<8x256xf32>
    %162 = arith.subf %146, %161 : vector<8x256xf32>
    %cst_45 = arith.constant 9.99999974E-6 : f32
    %163 = arith.addf %160, %cst_45 : f32
    %164 = math.rsqrt %163 : f32
    %165 = vector.broadcast %164 : f32 to vector<8x256xf32>
    %166 = arith.mulf %162, %165 : vector<8x256xf32>
    %167 = vector.extract_strided_slice %124 {offsets = [16, 0], sizes = [8, 256], strides = [1, 1]} : vector<32x256xf32> to vector<8x256xf32>
    %168 = vector.shape_cast %167 : vector<8x256xf32> to vector<1x8x256xf32>
    %cst_46 = arith.constant dense<0.000000e+00> : vector<1xf32>
    %169 = vector.multi_reduction <add>, %168, %cst_46 [1, 2] : vector<1x8x256xf32> to vector<1xf32>
    %170 = vector.shape_cast %169 : vector<1xf32> to vector<1x1x1xf32>
    %171 = vector.extract %170[0, 0, 0] : f32 from vector<1x1x1xf32>
    %cst_47 = arith.constant 4.8828125E-4 : f32
    %172 = arith.mulf %171, %cst_47 : f32
    %173 = arith.mulf %167, %167 : vector<8x256xf32>
    %174 = vector.shape_cast %173 : vector<8x256xf32> to vector<1x8x256xf32>
    %cst_48 = arith.constant dense<0.000000e+00> : vector<1xf32>
    %175 = vector.multi_reduction <add>, %174, %cst_48 [1, 2] : vector<1x8x256xf32> to vector<1xf32>
    %176 = vector.shape_cast %175 : vector<1xf32> to vector<1x1x1xf32>
    %177 = vector.extract %176[0, 0, 0] : f32 from vector<1x1x1xf32>
    %cst_49 = arith.constant 4.8828125E-4 : f32
    %178 = arith.mulf %177, %cst_49 : f32
    %179 = arith.mulf %172, %172 : f32
    %180 = arith.subf %178, %179 : f32
    %cst_50 = arith.constant 0.000000e+00 : f32
    %181 = arith.maximumf %180, %cst_50 : f32
    %182 = vector.broadcast %172 : f32 to vector<8x256xf32>
    %183 = arith.subf %167, %182 : vector<8x256xf32>
    %cst_51 = arith.constant 9.99999974E-6 : f32
    %184 = arith.addf %181, %cst_51 : f32
    %185 = math.rsqrt %184 : f32
    %186 = vector.broadcast %185 : f32 to vector<8x256xf32>
    %187 = arith.mulf %183, %186 : vector<8x256xf32>
    %188 = vector.extract_strided_slice %124 {offsets = [24, 0], sizes = [8, 256], strides = [1, 1]} : vector<32x256xf32> to vector<8x256xf32>
    %189 = vector.shape_cast %188 : vector<8x256xf32> to vector<1x8x256xf32>
    %cst_52 = arith.constant dense<0.000000e+00> : vector<1xf32>
    %190 = vector.multi_reduction <add>, %189, %cst_52 [1, 2] : vector<1x8x256xf32> to vector<1xf32>
    %191 = vector.shape_cast %190 : vector<1xf32> to vector<1x1x1xf32>
    %192 = vector.extract %191[0, 0, 0] : f32 from vector<1x1x1xf32>
    %cst_53 = arith.constant 4.8828125E-4 : f32
    %193 = arith.mulf %192, %cst_53 : f32
    %194 = arith.mulf %188, %188 : vector<8x256xf32>
    %195 = vector.shape_cast %194 : vector<8x256xf32> to vector<1x8x256xf32>
    %cst_54 = arith.constant dense<0.000000e+00> : vector<1xf32>
    %196 = vector.multi_reduction <add>, %195, %cst_54 [1, 2] : vector<1x8x256xf32> to vector<1xf32>
    %197 = vector.shape_cast %196 : vector<1xf32> to vector<1x1x1xf32>
    %198 = vector.extract %197[0, 0, 0] : f32 from vector<1x1x1xf32>
    %cst_55 = arith.constant 4.8828125E-4 : f32
    %199 = arith.mulf %198, %cst_55 : f32
    %200 = arith.mulf %193, %193 : f32
    %201 = arith.subf %199, %200 : f32
    %cst_56 = arith.constant 0.000000e+00 : f32
    %202 = arith.maximumf %201, %cst_56 : f32
    %203 = vector.broadcast %193 : f32 to vector<8x256xf32>
    %204 = arith.subf %188, %203 : vector<8x256xf32>
    %cst_57 = arith.constant 9.99999974E-6 : f32
    %205 = arith.addf %202, %cst_57 : f32
    %206 = math.rsqrt %205 : f32
    %207 = vector.broadcast %206 : f32 to vector<8x256xf32>
    %208 = arith.mulf %204, %207 : vector<8x256xf32>
    %209 = tpu.concatenate %145, %166, %187, %208 in 0 : vector<8x256xf32>, vector<8x256xf32>, vector<8x256xf32>, vector<8x256xf32> -> vector<32x256xf32>
    %210 = vector.broadcast %119 : vector<32x1xf32> to vector<32x256xf32>
    %211 = arith.mulf %209, %210 : vector<32x256xf32>
    %212 = vector.broadcast %120 : vector<32x1xf32> to vector<32x256xf32>
    %213 = arith.addf %211, %212 : vector<32x256xf32>
    %cst_58 = arith.constant 0.000000e+00 : f32
    %214 = vector.broadcast %cst_58 : f32 to vector<32x256xf32>
    %215 = arith.maximumf %213, %214 : vector<32x256xf32>
    %c0_59 = arith.constant 0 : index
    %c0_60 = arith.constant 0 : index
    %216 = vector.load %arg6[%c0_59, %c0_60] : memref<32x256xf32, #tpu.memory_space<vmem>>, vector<32x256xf32>
    tpu.vector_store %arg6[%c0_59, %c0_60], %215 {strides = array<i32>} : memref<32x256xf32, #tpu.memory_space<vmem>>, vector<32x256xf32>,
    return
  }
  func.func @transform_0(%arg0: i32) -> (i32, i32) {
    %c0_i32 = arith.constant 0 : i32
    %c0_i32_0 = arith.constant 0 : i32
    return %c0_i32, %arg0 : i32, i32
  }
  func.func @transform_1(%arg0: i32) -> (i32, i32) {
    %c0_i32 = arith.constant 0 : i32
    %c0_i32_0 = arith.constant 0 : i32
    %c0_i32_1 = arith.constant 0 : i32
    return %c0_i32, %c0_i32_0 : i32, i32
  }
  func.func @transform_2(%arg0: i32) -> (i32, i32) {
    %c0_i32 = arith.constant 0 : i32
    %c0_i32_0 = arith.constant 0 : i32
    %c0_i32_1 = arith.constant 0 : i32
    return %c0_i32, %c0_i32_0 : i32, i32
  }
  func.func @transform_3(%arg0: i32) -> (i32, i32) {
    %c0_i32 = arith.constant 0 : i32
    %c0_i32_0 = arith.constant 0 : i32
    %c0_i32_1 = arith.constant 0 : i32
    return %c0_i32, %c0_i32_0 : i32, i32
  }
  func.func @transform_4(%arg0: i32) -> (i32, i32) {
    %c0_i32 = arith.constant 0 : i32
    %c0_i32_0 = arith.constant 0 : i32
    %c0_i32_1 = arith.constant 0 : i32
    return %c0_i32, %c0_i32_0 : i32, i32
  }
  func.func @transform_5(%arg0: i32) -> (i32, i32) {
    %c0_i32 = arith.constant 0 : i32
    %c0_i32_0 = arith.constant 0 : i32
    return %c0_i32, %arg0 : i32, i32
  }
}

</mosaic_0001>

<llo_original>
// kernel: fire_pallas.1
$region0: #{fire_pallas.1}
  #allocation0 [shape = 'u32[]', space=smem, size = 0x4, offset = 0x4, fixed_abs, tag = 'smem constant byte address 0x4 - core index']
  #allocation1 [shape = 'u32[72,128]{1,0:T(1,128)}', space=vmem, size = 0x9000, scoped, tag = 'internal scratch']
  %s0 = inlined_call_operand.vmem [shape: f32[4,512], index: 0, kind: input, shape index: {}]
  %s1 = inlined_call_operand.vmem [shape: bf16[8,4], index: 1, kind: input, shape index: {}]
  %s2 = inlined_call_operand.vmem [shape: f32[8,3], index: 2, kind: input, shape index: {}]
  %s3 = inlined_call_operand.vmem [shape: bf16[32,72], index: 3, kind: input, shape index: {}]
  %s4 = inlined_call_operand.vmem [shape: f32[32,3], index: 4, kind: input, shape index: {}]
  %s5 = inlined_call_operand.vmem [shape: f32[32,512], index: 5, kind: output, shape index: {}]
  %s6 = sld [smem:[#allocation0]]
  $region72: #{fire_pallas.1} parent=0
    _
  %s8 = ssub.s32 1, %s6
  %s9 = scalar_select 0, %s8, %s6
  $region1: #{fire_pallas.1} parent=0
    #allocation2 [shape = 'u8[65536]{0}', space=vmem, size = 0x10000, scoped, tag = 'output window, operand 0']
    loop: start=0, step=1, limit=4
    $region2: #{fire_pallas.1} parent=1 // loop_pre_header
      _
    $region3: #{fire_pallas.1} parent=1 // loop_header
      %s11 = sphi 0, %s15
      %p12 = scmp.ge.s32.totalorder %s11, 4
      %s21 = sphi 0, %s23
      %s24 = sphi 0, %s21
      %s25 = sphi 0, %s24
      %s41 = sphi 0, %s25
      %s45 = sphi 0, %s45
      %s47 = sphi 0, %s45
      %s48 = sphi 0, %s47
      %s62 = sphi 0, %s48
      %s66 = sphi 0, %s66
      %s68 = sphi 0, %s66
      %s69 = sphi 0, %s68
      %s83 = sphi 0, %s69
      %s87 = sphi 0, %s87
      %s89 = sphi 0, %s87
      %s90 = sphi 0, %s89
      %s104 = sphi 0, %s90
      %s108 = sphi 0, %s108
      %s110 = sphi 0, %s108
      %s111 = sphi 0, %s110
      %s125 = sphi 0, %s111
      %s131 = sphi 0, %s133
      %s134 = sphi 0, %s131
      %s135 = sphi 0, %s134
      %s151 = sphi 0, %s135
    $region4: #{fire_pallas.1} parent=1 // loop_header_branch
      %14 = sbr.rel (%p12) target = $region8
    $region5: #{fire_pallas.1} parent=1 // loop_body
      %s16 = ssub.s32 %s11, 1
      %s17 = ssub.s32 %s11, 2
      %s18 = sadd.s32 %s11, 1
      %s19 = ssub.s32 %s11, %s18
      %p20 = scmp.eq.s32.totalorder %s19, 0
      %s22 = sadd.s32 %s21, 1
      %s23 = scalar_select %p20, %s21, %s22
      %p26 = pneg %p20
      %p27 = scmp.eq.s32.totalorder %s11, 1
      %p28 = por %p26, %p27
      %p29 = scmp.ne.s32.totalorder %s21, %s24
      %p30 = scmp.eq.s32.totalorder %s11, 0
      %p31 = por %p29, %p30
      %p32 = scmp.ne.s32.totalorder %s21, %s24
      %p33 = scmp.eq.s32.totalorder %s16, 1
      %p34 = por %p32, %p33
      %p35 = scmp.ne.s32.totalorder %s24, %s25
      %p36 = scmp.eq.s32.totalorder %s16, 0
      %p37 = por %p35, %p36
      %p38 = scmp.ne.s32.totalorder %s24, %s25
      %p39 = scmp.eq.s32.totalorder %s17, 1
      %p40 = por %p38, %p39
      %p42 = scmp.ne.s32.totalorder %s25, %s41
      %p43 = scmp.eq.s32.totalorder %s17, 0
      %p44 = por %p42, %p43
      %s46 = sadd.s32 %s45, 1
      %p49 = scmp.eq.s32.totalorder %s11, 1
      %p50 = scmp.ne.s32.totalorder %s45, %s47
      %p51 = scmp.eq.s32.totalorder %s11, 0
      %p52 = por %p50, %p51
      %p53 = scmp.ne.s32.totalorder %s45, %s47
      %p54 = scmp.eq.s32.totalorder %s16, 1
      %p55 = por %p53, %p54
      %p56 = scmp.ne.s32.totalorder %s47, %s48
      %p57 = scmp.eq.s32.totalorder %s16, 0
      %p58 = por %p56, %p57
      %p59 = scmp.ne.s32.totalorder %s47, %s48
      %p60 = scmp.eq.s32.totalorder %s17, 1
      %p61 = por %p59, %p60
      %p63 = scmp.ne.s32.totalorder %s48, %s62
      %p64 = scmp.eq.s32.totalorder %s17, 0
      %p65 = por %p63, %p64
      %s67 = sadd.s32 %s66, 1
      %p70 = scmp.eq.s32.totalorder %s11, 1
      %p71 = scmp.ne.s32.totalorder %s66, %s68
      %p72 = scmp.eq.s32.totalorder %s11, 0
      %p73 = por %p71, %p72
      %p74 = scmp.ne.s32.totalorder %s66, %s68
      %p75 = scmp.eq.s32.totalorder %s16, 1
      %p76 = por %p74, %p75
      %p77 = scmp.ne.s32.totalorder %s68, %s69
      %p78 = scmp.eq.s32.totalorder %s16, 0
      %p79 = por %p77, %p78
      %p80 = scmp.ne.s32.totalorder %s68, %s69
      %p81 = scmp.eq.s32.totalorder %s17, 1
      %p82 = por %p80, %p81
      %p84 = scmp.ne.s32.totalorder %s69, %s83
      %p85 = scmp.eq.s32.totalorder %s17, 0
      %p86 = por %p84, %p85
      %s88 = sadd.s32 %s87, 1
      %p91 = scmp.eq.s32.totalorder %s11, 1
      %p92 = scmp.ne.s32.totalorder %s87, %s89
      %p93 = scmp.eq.s32.totalorder %s11, 0
      %p94 = por %p92, %p93
      %p95 = scmp.ne.s32.totalorder %s87, %s89
      %p96 = scmp.eq.s32.totalorder %s16, 1
      %p97 = por %p95, %p96
      %p98 = scmp.ne.s32.totalorder %s89, %s90
      %p99 = scmp.eq.s32.totalorder %s16, 0
      %p100 = por %p98, %p99
      %p101 = scmp.ne.s32.totalorder %s89, %s90
      %p102 = scmp.eq.s32.totalorder %s17, 1
      %p103 = por %p101, %p102
      %p105 = scmp.ne.s32.totalorder %s90, %s104
      %p106 = scmp.eq.s32.totalorder %s17, 0
      %p107 = por %p105, %p106
      %s109 = sadd.s32 %s108, 1
      %p112 = scmp.eq.s32.totalorder %s11, 1
      %p113 = scmp.ne.s32.totalorder %s108, %s110
      %p114 = scmp.eq.s32.totalorder %s11, 0
      %p115 = por %p113, %p114
      %p116 = scmp.ne.s32.totalorder %s108, %s110
      %p117 = scmp.eq.s32.totalorder %s16, 1
      %p118 = por %p116, %p117
      %p119 = scmp.ne.s32.totalorder %s110, %s111
      %p120 = scmp.eq.s32.totalorder %s16, 0
      %p121 = por %p119, %p120
      %p122 = scmp.ne.s32.totalorder %s110, %s111
      %p123 = scmp.eq.s32.totalorder %s17, 1
      %p124 = por %p122, %p123
      %p126 = scmp.ne.s32.totalorder %s111, %s125
      %p127 = scmp.eq.s32.totalorder %s17, 0
      %p128 = por %p126, %p127
      %s129 = ssub.s32 %s11, %s18
      %p130 = scmp.eq.s32.totalorder %s129, 0
      %s132 = sadd.s32 %s131, 1
      %s133 = scalar_select %p130, %s131, %s132
      %p136 = pneg %p130
      %p137 = scmp.eq.s32.totalorder %s11, 1
      %p138 = por %p136, %p137
      %p139 = scmp.ne.s32.totalorder %s131, %s134
      %p140 = scmp.eq.s32.totalorder %s11, 0
      %p141 = por %p139, %p140
      %p142 = scmp.ne.s32.totalorder %s131, %s134
      %p143 = scmp.eq.s32.totalorder %s16, 1
      %p144 = por %p142, %p143
      %p145 = scmp.ne.s32.totalorder %s134, %s135
      %p146 = scmp.eq.s32.totalorder %s16, 0
      %p147 = por %p145, %p146
      %p148 = scmp.ne.s32.totalorder %s134, %s135
      %p149 = scmp.eq.s32.totalorder %s17, 1
      %p150 = por %p148, %p149
      %p152 = scmp.ne.s32.totalorder %s135, %s151
      %p153 = scmp.eq.s32.totalorder %s17, 0
      %p154 = por %p152, %p153
      %p155 = scmp.le.s32.totalorder 1, %s11
      %p156 = scmp.lt.s32.totalorder %s11, 3
      %p157 = pnand %p155, %p156
      %p158 = pneg %p157
      // Predicated region
      $region9: #{fire_pallas.1} parent=5 // pred_check
        _
      $region10: #{fire_pallas.1} parent=5 // pred_check_branch
        %160 = sbr.rel (%p157) target = $region12
      $region11: #{fire_pallas.1} parent=5 // pred_region
        %s161 = ssub.s32 %s11, 1
        // Predicated region
        $region13: #{fire_pallas.1} parent=11 // pred_check
          %p162 = pneg %p58
        $region14: #{fire_pallas.1} parent=11 // pred_check_branch
          %164 = sbr.rel (%p162) target = $region16
        $region15: #{fire_pallas.1} parent=11 // pred_region
          _
        $region16: #{fire_pallas.1} parent=11 // pred_fallthru
          _
        // Predicated region
        $region17: #{fire_pallas.1} parent=11 // pred_check
          %p165 = pneg %p79
        $region18: #{fire_pallas.1} parent=11 // pred_check_branch
          %167 = sbr.rel (%p165) target = $region20
        $region19: #{fire_pallas.1} parent=11 // pred_region
          _
        $region20: #{fire_pallas.1} parent=11 // pred_fallthru
          _
        // Predicated region
        $region21: #{fire_pallas.1} parent=11 // pred_check
          %p168 = pneg %p100
        $region22: #{fire_pallas.1} parent=11 // pred_check_branch
          %170 = sbr.rel (%p168) target = $region24
        $region23: #{fire_pallas.1} parent=11 // pred_region
          _
        $region24: #{fire_pallas.1} parent=11 // pred_fallthru
          _
        // Predicated region
        $region25: #{fire_pallas.1} parent=11 // pred_check
          %p171 = pneg %p121
        $region26: #{fire_pallas.1} parent=11 // pred_check_branch
          %173 = sbr.rel (%p171) target = $region28
        $region27: #{fire_pallas.1} parent=11 // pred_region
          _
        $region28: #{fire_pallas.1} parent=11 // pred_fallthru
          _
      $region12: #{fire_pallas.1} parent=5 // pred_fallthru
        _
      %p174 = scmp.lt.s32.totalorder %s11, 2
      // Predicated region
      $region29: #{fire_pallas.1} parent=5 // pred_check
        %p175 = pneg %p174
      $region30: #{fire_pallas.1} parent=5 // pred_check_branch
        %177 = sbr.rel (%p175) target = $region32
      $region31: #{fire_pallas.1} parent=5 // pred_region
        // Predicated region
        $region33: #{fire_pallas.1} parent=31 // pred_check
          %p178 = pneg %p31
        $region34: #{fire_pallas.1} parent=31 // pred_check_branch
          %180 = sbr.rel (%p178) target = $region36
        $region35: #{fire_pallas.1} parent=31 // pred_region
          %s181 = smul.u32 2, %s11
          %p182 = scmp.lt.s32.totalorder %s181, 3
          %s183 = scalar_select %p182, %s181, 3
          %s184 = smul.addr %s183, 4
          %s185 = scalar_lea.vmem %s0, %s184
          %s186 = smul.u32 2, %s11
        $region36: #{fire_pallas.1} parent=31 // pred_fallthru
          _
      $region32: #{fire_pallas.1} parent=5 // pred_fallthru
        _
      %p187 = scmp.le.s32.totalorder 1, %s11
      %p188 = scmp.lt.s32.totalorder %s11, 3
      %p189 = pnand %p187, %p188
      %p190 = pneg %p189
      // Predicated region
      $region37: #{fire_pallas.1} parent=5 // pred_check
        _
      $region38: #{fire_pallas.1} parent=5 // pred_check_branch
        %192 = sbr.rel (%p189) target = $region40
      $region39: #{fire_pallas.1} parent=5 // pred_region
        %s193 = ssub.s32 %s11, 1
        %s194 = smul.u32 2, %s16
        %p195 = scmp.lt.s32.totalorder %s194, 3
        %s196 = scalar_select %p195, %s194, 3
        %s197 = smul.addr %s196, 4
        %s198 = scalar_lea.vmem %s0, %s197
        %p199 = pneg %p37
        %p200 = pneg %p34
        %p201 = pneg %p58
        %p202 = pneg %p55
        %p203 = pneg %p79
        %p204 = pneg %p76
        %p205 = pneg %p100
        %p206 = pneg %p97
        %p207 = pneg %p121
        %p208 = pneg %p118
        %p209 = pneg %p147
        %p210 = pneg %p144
        %s211 = sand.u32 %s134, 1
        %s212 = sand.u32 %s134, 1
        %s213 = smul.addr %s212, 64
        %s214 = scalar_lea.vmem [#allocation2], %s213
        %s215 = smul.u32 2, %s16
        %p216 = scmp.lt.s32.totalorder %s215, 3
        %s217 = scalar_select %p216, %s215, 3
        %s218 = smul.addr %s217, 4
        %s219 = scalar_lea.vmem %s0, %s218
        %s220 = smul.u32 2, %s16
        %s221 = smul.u32 2, %s16
        %v225 = vld [vmem:[%s219] sm:$0xff]
        %227 = vst [vmem:[#allocation1] ss:$2 sm:$0xff] %v225
        %v228 = vld.sshfl [vmem:[#allocation1] sm:$0xff pattern:$0x75316420]
        %v229 = vld.sshfl [vmem:[#allocation1 + $0x8] sm:$0xff pattern:$0x75316420]
        %v232 = vpack.c.bf16 %v228, %v228
        %v233 = vpack.c.bf16 %v229, %v229
        %v234 = vld [vmem:[%s2] sm:$0xff]
        %v235 = vld [vmem:[%s1] sm:$0xf]
        %237 = vset.pattern.permute.xlu0 0
        %238 = vperm.xlu0 %237, %v234
        %v239 = vpop.permute.xlu0 %238
        %vm241 = vcmask 31744
        %v243 = vsel %vm241, %v235, 0
        %vm245 = vcmask 1041408
        %v247 = vsel %vm245, %v232, 0
        %v250 = vsel %vm245, %v233, 0
        %252 = vmatpush.bf16.msra.mxu0 0
        %253 = vmatpush.bf16.msra.mxu0 0
        %254 = vmatpush.bf16.msra.mxu0 0
        %255 = vmatpush.bf16.msra.mxu0 0
        %256 = vmatpush.bf16.msra.mxu0 0
        %257 = vmatpush.bf16.msra.mxu0 0
        %258 = vmatpush.bf16.msra.mxu0 0
        %259 = vmatpush.bf16.msra.mxu0 %v247
        %260 = vmatmul.bf16.gmra.mxu0 %v243
        %v261 = vpop.f32.mrf.mxu0
        %v262 = vadd.f32 %v239, %v261
        %v263 = vpop.f32.mrf.mxu0
        %264 = vdwg.mxu0
        %265 = vmatpush.bf16.msra.mxu0 0
        %266 = vmatpush.bf16.msra.mxu0 0
        %267 = vmatpush.bf16.msra.mxu0 0
        %268 = vmatpush.bf16.msra.mxu0 0
        %269 = vmatpush.bf16.msra.mxu0 0
        %270 = vmatpush.bf16.msra.mxu0 0
        %271 = vmatpush.bf16.msra.mxu0 0
        %272 = vmatpush.bf16.msra.mxu0 %v250
        %273 = vmatmul.bf16.gmra.mxu0 %v243
        %v274 = vpop.f32.mrf.mxu0
        %v275 = vadd.f32 %v239, %v274
        %v276 = vpop.f32.mrf.mxu0
        %277 = vdwg.mxu0
        %vm278 = vcmask 1043456
        %v279 = vsel %vm278, %v262, 0.0
        %v280 = vsel %vm278, %v275, 0.0
        %v281 = vadd.f32 %v279, %v280
        %282 = vadd.xlane.f32.xlu0 %v281
        %v283 = vpop.xlane.xlu0 %282
        %v284 = vrot.slane %v283, 4
        %v285 = vadd.f32 %v283, %v284
        %v286 = vrot.slane %v285, 2
        %v287 = vadd.f32 %v285, %v286
        %v288 = vrot.slane %v287, 1
        %v289 = vadd.f32 %v287, %v288
        %s290 = vtos %v289
        %s291 = smul.f32 %s290, 0.0009765625
        %v292 = vmul.f32 %v262, %v262
        %v293 = vmul.f32 %v275, %v275
        %v294 = vsel %vm278, %v292, 0.0
        %v295 = vsel %vm278, %v293, 0.0
        %v296 = vadd.f32 %v294, %v295
        %297 = vadd.xlane.f32.xlu0 %v296
        %v298 = vpop.xlane.xlu0 %297
        %v299 = vrot.slane %v298, 4
        %v300 = vadd.f32 %v298, %v299
        %v301 = vrot.slane %v300, 2
        %v302 = vadd.f32 %v300, %v301
        %v303 = vrot.slane %v302, 1
        %v304 = vadd.f32 %v302, %v303
        %s305 = vtos %v304
        %s306 = smul.f32 %s305, 0.0009765625
        %s307 = smul.f32 %s291, %s291
        %s308 = ssub.f32 %s306, %s307
        %s309 = smax.f32 %s308, 0.0
        %v310 = vstv %s291
        %v311 = vsub.f32 %v262, %v310
        %v312 = vsub.f32 %v275, %v310
        %s313 = sadd.f32 %s309, 1e-05
        %v314 = vstv %s313
        %v315 = vrsqrt.pop %v314
        %v316 = vmul.f32 %v315, %v314
        %v317 = vmul.f32 %v316, %v315
        %v318 = vmul.f32 0.5, %v317
        %v319 = vsub.f32 1.5, %v318
        %v320 = vmul.f32 %v315, %v319
        %vm321 = vweird.f32 %v314
        %vm322 = vweird.f32 %v315
        %vm323 = vmor %vm321, %vm322
        %v324 = vsel %vm323, %v315, %v320
        %s325 = vtos %v324
        %v326 = vstv %s325
        %v327 = vmul.f32 %v311, %v326
        %v328 = vmul.f32 %v312, %v326
        %v331 = vrot.slane %v262, 4
        %v332 = vrot.slane %v275, 4
        %v335 = vsel %vm278, %v331, 0.0
        %v336 = vsel %vm278, %v332, 0.0
        %v337 = vadd.f32 %v335, %v336
        %338 = vadd.xlane.f32.xlu0 %v337
        %v339 = vpop.xlane.xlu0 %338
        %v340 = vrot.slane %v339, 4
        %v341 = vadd.f32 %v339, %v340
        %v342 = vrot.slane %v341, 2
        %v343 = vadd.f32 %v341, %v342
        %v344 = vrot.slane %v343, 1
        %v345 = vadd.f32 %v343, %v344
        %s346 = vtos %v345
        %s347 = smul.f32 %s346, 0.0009765625
        %v350 = vrot.slane %v292, 4
        %v351 = vrot.slane %v293, 4
        %v354 = vsel %vm278, %v350, 0.0
        %v355 = vsel %vm278, %v351, 0.0
        %v356 = vadd.f32 %v354, %v355
        %357 = vadd.xlane.f32.xlu0 %v356
        %v358 = vpop.xlane.xlu0 %357
        %v359 = vrot.slane %v358, 4
        %v360 = vadd.f32 %v358, %v359
        %v361 = vrot.slane %v360, 2
        %v362 = vadd.f32 %v360, %v361
        %v363 = vrot.slane %v362, 1
        %v364 = vadd.f32 %v362, %v363
        %s365 = vtos %v364
        %s366 = smul.f32 %s365, 0.0009765625
        %s367 = smul.f32 %s347, %s347
        %s368 = ssub.f32 %s366, %s367
        %s369 = smax.f32 %s368, 0.0
        %v370 = vstv %s347
        %v371 = vsub.f32 %v262, %v370
        %v372 = vsub.f32 %v275, %v370
        %s373 = sadd.f32 %s369, 1e-05
        %v374 = vstv %s373
        %v375 = vrsqrt.pop %v374
        %v376 = vmul.f32 %v375, %v374
        %v377 = vmul.f32 %v376, %v375
        %v378 = vmul.f32 0.5, %v377
        %v379 = vsub.f32 1.5, %v378
        %v380 = vmul.f32 %v375, %v379
        %vm381 = vweird.f32 %v374
        %vm382 = vweird.f32 %v375
        %vm383 = vmor %vm381, %vm382
        %v384 = vsel %vm383, %v375, %v380
        %s385 = vtos %v384
        %v386 = vstv %s385
        %v387 = vmul.f32 %v371, %v386
        %v388 = vmul.f32 %v372, %v386
        %v389 = vsel %vm278, %v327, %v387
        %v390 = vsel %vm278, %v328, %v388
        %391 = vset.pattern.permute.xlu0 1
        %392 = vperm.xlu0 %391, %v234
        %v393 = vpop.permute.xlu0 %392
        %v395 = vmul.f32 %v389, %v393
        %v396 = vmul.f32 %v390, %v393
        %397 = vset.pattern.permute.xlu0 2
        %398 = vperm.xlu0 %397, %v234
        %v399 = vpop.permute.xlu0 %398
        %v401 = vadd.f32 %v395, %v399
        %v402 = vadd.f32 %v396, %v399
        %v403 = vmax.f32 %v401, 0.0
        %v404 = vmax.f32 %v402, 0.0
        %v405 = vpack.c.bf16 %v404, %v403
        %v407 = vunpack.c.l.b16 %v405
        %v408 = vunpack.c.h.b16 %v405
        %v409 = vpack.c.b16 %v407, %v407
        %v410 = vpack.c.b16 %v408, %v408
        %411 = vrot.lane.b32.xlu0 %v409, 17
        %v412 = vpop.permute.xlu0 %411
        %413 = vrot.lane.b32.xlu0 %v410, 17
        %v414 = vpop.permute.xlu0 %413
        %vm415 = vcmask 138240
        %v416 = vsel %vm415, %v412, %v414
        %vm418 = vcmask 138240
        %v421 = vsel %vm418, 0, %v412
        %v424 = vsel %vm418, %v414, 0
        %v426 = vlaneseq
        %v427 = vand.u32 %v426, 127
        %v428 = vadd.s32 %v427, 128
        %vm429 = vcmp.lt.s32.totalorder %v427, 0
        %v430 = vsub.s32 0, %v427
        %v431 = vsel %vm429, %v430, %v427
        %v432 = vshrl.u32 %v431, 4
        %v433 = vand.u32 %v431, 15
        %v434 = vsub.s32 0, %v433
        %v435 = vsel %vm429, %v434, %v433
        %vm436 = vcmp.lt.s32.totalorder %v428, 0
        %v437 = vsub.s32 0, %v428
        %v438 = vsel %vm436, %v437, %v428
        %v439 = vshrl.u32 %v438, 4
        %v440 = vand.u32 %v438, 15
        %v441 = vsub.s32 0, %v440
        %v442 = vsel %vm436, %v441, %v440
        %vm443 = vcmp.ne.s32.totalorder %v435, 0
        %vm444 = vcmp.ne.s32.totalorder %v442, 0
        %vm445 = vcmp.lt.s32.totalorder %v435, 0
        %vm446 = vcmp.lt.s32.totalorder %v442, 0
        %vm447 = vmand %vm445, %vm443
        %vm448 = vmand %vm446, %vm444
        %v449 = vadd.s32 %v435, 16
        %v450 = vadd.s32 %v442, 16
        %v451 = vsel %vm447, %v449, %v435
        %v452 = vsel %vm448, %v450, %v442
        %vm453 = vcmp.gt.s32.totalorder %v451, 0
        %vm454 = vcmp.gt.s32.totalorder %v452, 0
        %vm455 = vcmp.lt.s32.totalorder %v451, 15
        %vm456 = vcmp.lt.s32.totalorder %v452, 15
        %v457 = vsel %vm453, 1, 0
        %v458 = vsel %vm454, 1, 0
        %vm459 = vcmp.eq.s32.totalorder %v457, 1
        %vm460 = vcmp.eq.s32.totalorder %v458, 1
        %vm461 = vmpackc.low %vm460, %vm459
        %v462 = vsel %vm461, 65537, 0
        %v463 = vperm.slane %v462, 0
        %v464 = vperm.slane %v462, 4
        %v465 = vunpack.c.l.b16 %v463
        %v466 = vunpack.c.h.b16 %v463
        %v467 = vunpack.c.l.b16 0
        %v468 = vunpack.c.h.b16 0
        %vm469 = vcmp.ne.s32.totalorder %v465, %v467
        %vm470 = vcmp.ne.s32.totalorder %v466, %v468
        %vm471 = vmpackc.low %vm470, %vm469
        %v472 = vunpack.c.l.b16 %v464
        %v473 = vunpack.c.h.b16 %v464
        %v474 = vunpack.c.l.b16 0
        %v475 = vunpack.c.h.b16 0
        %vm476 = vcmp.ne.s32.totalorder %v472, %v474
        %vm477 = vcmp.ne.s32.totalorder %v473, %v475
        %vm478 = vmpackc.low %vm477, %vm476
        %v479 = vsel %vm471, %v421, 0
        %v480 = vsel %vm478, %v416, 0
        %v481 = vsel %vm455, 1, 0
        %v482 = vsel %vm456, 1, 0
        %vm483 = vcmp.eq.s32.totalorder %v481, 1
        %vm484 = vcmp.eq.s32.totalorder %v482, 1
        %vm485 = vmpackc.low %vm484, %vm483
        %v486 = vsel %vm485, 65537, 0
        %v487 = vperm.slane %v486, 0
        %v488 = vperm.slane %v486, 4
        %489 = vrot.lane.b32.xlu0 %v487, 2
        %v490 = vpop.permute.xlu0 %489
        %491 = vrot.lane.b32.xlu0 %v488, 2
        %v492 = vpop.permute.xlu0 %491
        %vm493 = vcmask 15360
        %v494 = vsel %vm493, %v490, %v492
        %v495 = vunpack.c.l.b16 %v490
        %v496 = vunpack.c.h.b16 %v490
        %v497 = vunpack.c.l.b16 0
        %v498 = vunpack.c.h.b16 0
        %vm499 = vcmp.ne.s32.totalorder %v495, %v497
        %vm500 = vcmp.ne.s32.totalorder %v496, %v498
        %vm501 = vmpackc.low %vm500, %vm499
        %v502 = vunpack.c.l.b16 %v494
        %v503 = vunpack.c.h.b16 %v494
        %v504 = vunpack.c.l.b16 0
        %v505 = vunpack.c.h.b16 0
        %vm506 = vcmp.ne.s32.totalorder %v502, %v504
        %vm507 = vcmp.ne.s32.totalorder %v503, %v505
        %vm508 = vmpackc.low %vm507, %vm506
        %v509 = vunpack.c.l.b16 %v492
        %v510 = vunpack.c.h.b16 %v492
        %v511 = vunpack.c.l.b16 0
        %v512 = vunpack.c.h.b16 0
        %vm513 = vcmp.ne.s32.totalorder %v509, %v511
        %vm514 = vcmp.ne.s32.totalorder %v510, %v512
        %vm515 = vmpackc.low %vm514, %vm513
        %v516 = vsel %vm501, %v421, 0
        %v517 = vsel %vm508, %v416, 0
        %v518 = vsel %vm515, %v424, 0
        %519 = vrot.lane.b32.xlu0 %v463, 16
        %v520 = vpop.permute.xlu0 %519
        %521 = vrot.lane.b32.xlu0 %v464, 16
        %v522 = vpop.permute.xlu0 %521
        %vm523 = vcmask 130048
        %v524 = vsel %vm523, %v520, %v522
        %v525 = vunpack.c.l.b16 %v520
        %v526 = vunpack.c.h.b16 %v520
        %v527 = vunpack.c.l.b16 0
        %v528 = vunpack.c.h.b16 0
        %vm529 = vcmp.ne.s32.totalorder %v525, %v527
        %vm530 = vcmp.ne.s32.totalorder %v526, %v528
        %vm531 = vmpackc.low %vm530, %vm529
        %v532 = vunpack.c.l.b16 %v524
        %v533 = vunpack.c.h.b16 %v524
        %v534 = vunpack.c.l.b16 0
        %v535 = vunpack.c.h.b16 0
        %vm536 = vcmp.ne.s32.totalorder %v532, %v534
        %vm537 = vcmp.ne.s32.totalorder %v533, %v535
        %vm538 = vmpackc.low %vm537, %vm536
        %v539 = vunpack.c.l.b16 %v522
        %v540 = vunpack.c.h.b16 %v522
        %v541 = vunpack.c.l.b16 0
        %v542 = vunpack.c.h.b16 0
        %vm543 = vcmp.ne.s32.totalorder %v539, %v541
        %vm544 = vcmp.ne.s32.totalorder %v540, %v542
        %vm545 = vmpackc.low %vm544, %vm543
        %v546 = vsel %vm531, %v421, 0
        %v547 = vsel %vm538, %v416, 0
        %v548 = vsel %vm545, %v424, 0
        %549 = vrot.lane.b32.xlu0 %v487, 18
        %v550 = vpop.permute.xlu0 %549
        %551 = vrot.lane.b32.xlu0 %v488, 18
        %v552 = vpop.permute.xlu0 %551
        %vm553 = vcmask 146432
        %v554 = vsel %vm553, %v550, %v552
        %v555 = vunpack.c.l.b16 %v550
        %v556 = vunpack.c.h.b16 %v550
        %v557 = vunpack.c.l.b16 0
        %v558 = vunpack.c.h.b16 0
        %vm559 = vcmp.ne.s32.totalorder %v555, %v557
        %vm560 = vcmp.ne.s32.totalorder %v556, %v558
        %vm561 = vmpackc.low %vm560, %vm559
        %v562 = vunpack.c.l.b16 %v554
        %v563 = vunpack.c.h.b16 %v554
        %v564 = vunpack.c.l.b16 0
        %v565 = vunpack.c.h.b16 0
        %vm566 = vcmp.ne.s32.totalorder %v562, %v564
        %vm567 = vcmp.ne.s32.totalorder %v563, %v565
        %vm568 = vmpackc.low %vm567, %vm566
        %v569 = vunpack.c.l.b16 %v552
        %v570 = vunpack.c.h.b16 %v552
        %v571 = vunpack.c.l.b16 0
        %v572 = vunpack.c.h.b16 0
        %vm573 = vcmp.ne.s32.totalorder %v569, %v571
        %vm574 = vcmp.ne.s32.totalorder %v570, %v572
        %vm575 = vmpackc.low %vm574, %vm573
        %v576 = vsel %vm561, %v421, 0
        %v577 = vsel %vm568, %v416, 0
        %v578 = vsel %vm575, %v424, 0
        %579 = vrot.lane.b32.xlu0 %v463, 32
        %v580 = vpop.permute.xlu0 %579
        %581 = vrot.lane.b32.xlu0 %v464, 32
        %v582 = vpop.permute.xlu0 %581
        %vm583 = vcmask 261120
        %v584 = vsel %vm583, %v580, %v582
        %v585 = vunpack.c.l.b16 %v580
        %v586 = vunpack.c.h.b16 %v580
        %v587 = vunpack.c.l.b16 0
        %v588 = vunpack.c.h.b16 0
        %vm589 = vcmp.ne.s32.totalorder %v585, %v587
        %vm590 = vcmp.ne.s32.totalorder %v586, %v588
        %vm591 = vmpackc.low %vm590, %vm589
        %v592 = vunpack.c.l.b16 %v584
        %v593 = vunpack.c.h.b16 %v584
        %v594 = vunpack.c.l.b16 0
        %v595 = vunpack.c.h.b16 0
        %vm596 = vcmp.ne.s32.totalorder %v592, %v594
        %vm597 = vcmp.ne.s32.totalorder %v593, %v595
        %vm598 = vmpackc.low %vm597, %vm596
        %v599 = vunpack.c.l.b16 %v582
        %v600 = vunpack.c.h.b16 %v582
        %v601 = vunpack.c.l.b16 0
        %v602 = vunpack.c.h.b16 0
        %vm603 = vcmp.ne.s32.totalorder %v599, %v601
        %vm604 = vcmp.ne.s32.totalorder %v600, %v602
        %vm605 = vmpackc.low %vm604, %vm603
        %v606 = vsel %vm591, %v421, 0
        %v607 = vsel %vm598, %v416, 0
        %v608 = vsel %vm605, %v424, 0
        %609 = vrot.lane.b32.xlu0 %v487, 34
        %v610 = vpop.permute.xlu0 %609
        %611 = vrot.lane.b32.xlu0 %v488, 34
        %v612 = vpop.permute.xlu0 %611
        %vm613 = vcmask 277504
        %v614 = vsel %vm613, %v610, %v612
        %v615 = vunpack.c.l.b16 %v610
        %v616 = vunpack.c.h.b16 %v610
        %v617 = vunpack.c.l.b16 0
        %v618 = vunpack.c.h.b16 0
        %vm619 = vcmp.ne.s32.totalorder %v615, %v617
        %vm620 = vcmp.ne.s32.totalorder %v616, %v618
        %vm621 = vmpackc.low %vm620, %vm619
        %v622 = vunpack.c.l.b16 %v614
        %v623 = vunpack.c.h.b16 %v614
        %v624 = vunpack.c.l.b16 0
        %v625 = vunpack.c.h.b16 0
        %vm626 = vcmp.ne.s32.totalorder %v622, %v624
        %vm627 = vcmp.ne.s32.totalorder %v623, %v625
        %vm628 = vmpackc.low %vm627, %vm626
        %v629 = vunpack.c.l.b16 %v612
        %v630 = vunpack.c.h.b16 %v612
        %v631 = vunpack.c.l.b16 0
        %v632 = vunpack.c.h.b16 0
        %vm633 = vcmp.ne.s32.totalorder %v629, %v631
        %vm634 = vcmp.ne.s32.totalorder %v630, %v632
        %vm635 = vmpackc.low %vm634, %vm633
        %v636 = vsel %vm621, %v421, 0
        %v637 = vsel %vm628, %v416, 0
        %v638 = vsel %vm635, %v424, 0
        %v641 = vrot.slane %v421, 4
        %v642 = vrot.slane %v416, 4
        %v643 = vrot.slane %v424, 4
        %644 = vrot.lane.b32.xlu0 %v641, 127
        %v645 = vpop.permute.xlu0 %644
        %646 = vrot.lane.b32.xlu0 %v642, 127
        %v647 = vpop.permute.xlu0 %646
        %648 = vrot.lane.b32.xlu0 %v643, 127
        %v649 = vpop.permute.xlu0 %648
        %vm650 = vcmask 1039360
        %v651 = vsel %vm650, %v645, %v647
        %v652 = vsel %vm650, %v647, %v649
        %656 = vrot.lane.b32.xlu0 %v516, 126
        %v657 = vpop.permute.xlu0 %656
        %658 = vrot.lane.b32.xlu0 %v517, 126
        %v659 = vpop.permute.xlu0 %658
        %660 = vrot.lane.b32.xlu0 %v518, 126
        %v661 = vpop.permute.xlu0 %660
        %vm662 = vcmask 1031168
        %v663 = vsel %vm662, %v657, %v659
        %v664 = vsel %vm662, %v659, %v661
        %v668 = vrot.slane %v546, 4
        %v669 = vrot.slane %v547, 4
        %v670 = vrot.slane %v548, 4
        %671 = vrot.lane.b32.xlu0 %v668, 112
        %v672 = vpop.permute.xlu0 %671
        %673 = vrot.lane.b32.xlu0 %v669, 112
        %v674 = vpop.permute.xlu0 %673
        %675 = vrot.lane.b32.xlu0 %v670, 112
        %v676 = vpop.permute.xlu0 %675
        %vm677 = vcmask 916480
        %v678 = vsel %vm677, %v672, %v674
        %v679 = vsel %vm677, %v674, %v676
        %680 = vrot.lane.b32.xlu0 %v421, 111
        %v681 = vpop.permute.xlu0 %680
        %682 = vrot.lane.b32.xlu0 %v416, 111
        %v683 = vpop.permute.xlu0 %682
        %684 = vrot.lane.b32.xlu0 %v424, 111
        %v685 = vpop.permute.xlu0 %684
        %vm686 = vcmask 908288
        %v687 = vsel %vm686, %v681, %v683
        %v688 = vsel %vm686, %v683, %v685
        %v692 = vrot.slane %v576, 4
        %v693 = vrot.slane %v577, 4
        %v694 = vrot.slane %v578, 4
        %695 = vrot.lane.b32.xlu0 %v692, 110
        %v696 = vpop.permute.xlu0 %695
        %697 = vrot.lane.b32.xlu0 %v693, 110
        %v698 = vpop.permute.xlu0 %697
        %699 = vrot.lane.b32.xlu0 %v694, 110
        %v700 = vpop.permute.xlu0 %699
        %vm701 = vcmask 900096
        %v702 = vsel %vm701, %v696, %v698
        %v703 = vsel %vm701, %v698, %v700
        %707 = vrot.lane.b32.xlu0 %v606, 96
        %v708 = vpop.permute.xlu0 %707
        %709 = vrot.lane.b32.xlu0 %v607, 96
        %v710 = vpop.permute.xlu0 %709
        %711 = vrot.lane.b32.xlu0 %v608, 96
        %v712 = vpop.permute.xlu0 %711
        %vm713 = vcmask 785408
        %v714 = vsel %vm713, %v708, %v710
        %v715 = vsel %vm713, %v710, %v712
        %716 = vrot.lane.b32.xlu0 %v641, 95
        %v717 = vpop.permute.xlu0 %716
        %718 = vrot.lane.b32.xlu0 %v642, 95
        %v719 = vpop.permute.xlu0 %718
        %720 = vrot.lane.b32.xlu0 %v643, 95
        %v721 = vpop.permute.xlu0 %720
        %vm722 = vcmask 777216
        %v723 = vsel %vm722, %v717, %v719
        %v724 = vsel %vm722, %v719, %v721
        %728 = vrot.lane.b32.xlu0 %v636, 94
        %v729 = vpop.permute.xlu0 %728
        %730 = vrot.lane.b32.xlu0 %v637, 94
        %v731 = vpop.permute.xlu0 %730
        %732 = vrot.lane.b32.xlu0 %v638, 94
        %v733 = vpop.permute.xlu0 %732
        %vm734 = vcmask 769024
        %v735 = vsel %vm734, %v729, %v731
        %v736 = vsel %vm734, %v731, %v733
        %v739 = vsel %vm278, %v479, %v651
        %v743 = vsel %vm278, %v480, %v652
        %v747 = vsel %vm278, %v663, %v678
        %v751 = vsel %vm278, %v664, %v679
        %v755 = vsel %vm278, %v687, %v702
        %v759 = vsel %vm278, %v688, %v703
        %v763 = vsel %vm278, %v714, %v723
        %v767 = vsel %vm278, %v715, %v724
        %v769 = vld [vmem:[%s4] sm:$0xff]
        %v770 = vld [vmem:[%s4 + $0x8] sm:$0xff]
        %v771 = vld [vmem:[%s4 + $0x10] sm:$0xff]
        %v772 = vld [vmem:[%s4 + $0x18] sm:$0xff]
        %v773 = vld [vmem:[%s3] sm:$0xf]
        %v774 = vld [vmem:[%s3 + $0x4] sm:$0xf]
        %v775 = vld [vmem:[%s3 + $0x8] sm:$0xf]
        %v776 = vld [vmem:[%s3 + $0xc] sm:$0xf]
        %778 = vset.pattern.permute.xlu0 0
        %779 = vperm.xlu0 %778, %v769
        %v780 = vpop.permute.xlu0 %779
        %783 = vset.pattern.permute.xlu0 0
        %784 = vperm.xlu0 %783, %v770
        %v785 = vpop.permute.xlu0 %784
        %788 = vset.pattern.permute.xlu0 0
        %789 = vperm.xlu0 %788, %v771
        %v790 = vpop.permute.xlu0 %789
        %793 = vset.pattern.permute.xlu0 0
        %794 = vperm.xlu0 %793, %v772
        %v795 = vpop.permute.xlu0 %794
        %v801 = vunpack.c.l.b16 %v773
        %v802 = vunpack.c.l.b16 %v774
        %v803 = vunpack.c.l.b16 %v775
        %v804 = vunpack.c.l.b16 %v776
        %v805 = vpack.c.b16 %v802, %v801
        %v806 = vpack.c.b16 %v804, %v803
        %vm807 = vcmask 588800
        %v809 = vsel %vm807, %v805, 0
        %v812 = vsel %vm807, %v806, 0
        %v815 = vsel %vm278, %v735, 0
        %v818 = vsel %vm278, %v736, 0
        %820 = vmatpush.bf16.msra.mxu0 0
        %821 = vmatpush.bf16.msra.mxu0 0
        %822 = vmatpush.bf16.msra.mxu0 0
        %823 = vmatpush.bf16.msra.mxu0 %v815
        %824 = vmatpush.bf16.msra.mxu0 %v763
        %825 = vmatpush.bf16.msra.mxu0 %v755
        %826 = vmatpush.bf16.msra.mxu0 %v747
        %827 = vmatpush.bf16.msra.mxu0 %v739
        %828 = vmatmul.bf16.gmra.mxu0 %v809
        %v829 = vpop.f32.mrf.mxu0
        %v830 = vadd.f32 %v780, %v829
        %v831 = vpop.f32.mrf.mxu0
        %v832 = vadd.f32 %v785, %v831
        %833 = vmatmul.bf16.gmra.mxu0 %v812
        %v834 = vpop.f32.mrf.mxu0
        %v835 = vadd.f32 %v790, %v834
        %v836 = vpop.f32.mrf.mxu0
        %v837 = vadd.f32 %v795, %v836
        %838 = vdwg.mxu0
        %839 = vmatpush.bf16.msra.mxu0 0
        %840 = vmatpush.bf16.msra.mxu0 0
        %841 = vmatpush.bf16.msra.mxu0 0
        %842 = vmatpush.bf16.msra.mxu0 %v818
        %843 = vmatpush.bf16.msra.mxu0 %v767
        %844 = vmatpush.bf16.msra.mxu0 %v759
        %845 = vmatpush.bf16.msra.mxu0 %v751
        %846 = vmatpush.bf16.msra.mxu0 %v743
        %847 = vmatmul.bf16.gmra.mxu0 %v809
        %v848 = vpop.f32.mrf.mxu0
        %v849 = vadd.f32 %v780, %v848
        %v850 = vpop.f32.mrf.mxu0
        %v851 = vadd.f32 %v785, %v850
        %852 = vmatmul.bf16.gmra.mxu0 %v812
        %v853 = vpop.f32.mrf.mxu0
        %v854 = vadd.f32 %v790, %v853
        %v855 = vpop.f32.mrf.mxu0
        %v856 = vadd.f32 %v795, %v855
        %857 = vdwg.mxu0
        %v858 = vadd.f32 %v830, %v849
        %859 = vadd.xlane.f32.xlu0 %v858
        %v860 = vpop.xlane.xlu0 %859
        %v861 = vrot.slane %v860, 4
        %v862 = vadd.f32 %v860, %v861
        %v863 = vrot.slane %v862, 2
        %v864 = vadd.f32 %v862, %v863
        %v865 = vrot.slane %v864, 1
        %v866 = vadd.f32 %v864, %v865
        %s867 = vtos %v866
        %s868 = smul.f32 %s867, 0.00048828125
        %v869 = vmul.f32 %v830, %v830
        %v870 = vmul.f32 %v849, %v849
        %v871 = vadd.f32 %v869, %v870
        %872 = vadd.xlane.f32.xlu0 %v871
        %v873 = vpop.xlane.xlu0 %872
        %v874 = vrot.slane %v873, 4
        %v875 = vadd.f32 %v873, %v874
        %v876 = vrot.slane %v875, 2
        %v877 = vadd.f32 %v875, %v876
        %v878 = vrot.slane %v877, 1
        %v879 = vadd.f32 %v877, %v878
        %s880 = vtos %v879
        %s881 = smul.f32 %s880, 0.00048828125
        %s882 = smul.f32 %s868, %s868
        %s883 = ssub.f32 %s881, %s882
        %s884 = smax.f32 %s883, 0.0
        %v885 = vstv %s868
        %v886 = vsub.f32 %v830, %v885
        %v887 = vsub.f32 %v849, %v885
        %s888 = sadd.f32 %s884, 1e-05
        %v889 = vstv %s888
        %v890 = vrsqrt.pop %v889
        %v891 = vmul.f32 %v890, %v889
        %v892 = vmul.f32 %v891, %v890
        %v893 = vmul.f32 0.5, %v892
        %v894 = vsub.f32 1.5, %v893
        %v895 = vmul.f32 %v890, %v894
        %vm896 = vweird.f32 %v889
        %vm897 = vweird.f32 %v890
        %vm898 = vmor %vm896, %vm897
        %v899 = vsel %vm898, %v890, %v895
        %s900 = vtos %v899
        %v901 = vstv %s900
        %v902 = vmul.f32 %v886, %v901
        %v903 = vmul.f32 %v887, %v901
        %v904 = vadd.f32 %v832, %v851
        %905 = vadd.xlane.f32.xlu0 %v904
        %v906 = vpop.xlane.xlu0 %905
        %v907 = vrot.slane %v906, 4
        %v908 = vadd.f32 %v906, %v907
        %v909 = vrot.slane %v908, 2
        %v910 = vadd.f32 %v908, %v909
        %v911 = vrot.slane %v910, 1
        %v912 = vadd.f32 %v910, %v911
        %s913 = vtos %v912
        %s914 = smul.f32 %s913, 0.00048828125
        %v915 = vmul.f32 %v832, %v832
        %v916 = vmul.f32 %v851, %v851
        %v917 = vadd.f32 %v915, %v916
        %918 = vadd.xlane.f32.xlu0 %v917
        %v919 = vpop.xlane.xlu0 %918
        %v920 = vrot.slane %v919, 4
        %v921 = vadd.f32 %v919, %v920
        %v922 = vrot.slane %v921, 2
        %v923 = vadd.f32 %v921, %v922
        %v924 = vrot.slane %v923, 1
        %v925 = vadd.f32 %v923, %v924
        %s926 = vtos %v925
        %s927 = smul.f32 %s926, 0.00048828125
        %s928 = smul.f32 %s914, %s914
        %s929 = ssub.f32 %s927, %s928
        %s930 = smax.f32 %s929, 0.0
        %v931 = vstv %s914
        %v932 = vsub.f32 %v832, %v931
        %v933 = vsub.f32 %v851, %v931
        %s934 = sadd.f32 %s930, 1e-05
        %v935 = vstv %s934
        %v936 = vrsqrt.pop %v935
        %v937 = vmul.f32 %v936, %v935
        %v938 = vmul.f32 %v937, %v936
        %v939 = vmul.f32 0.5, %v938
        %v940 = vsub.f32 1.5, %v939
        %v941 = vmul.f32 %v936, %v940
        %vm942 = vweird.f32 %v935
        %vm943 = vweird.f32 %v936
        %vm944 = vmor %vm942, %vm943
        %v945 = vsel %vm944, %v936, %v941
        %s946 = vtos %v945
        %v947 = vstv %s946
        %v948 = vmul.f32 %v932, %v947
        %v949 = vmul.f32 %v933, %v947
        %v950 = vadd.f32 %v835, %v854
        %951 = vadd.xlane.f32.xlu0 %v950
        %v952 = vpop.xlane.xlu0 %951
        %v953 = vrot.slane %v952, 4
        %v954 = vadd.f32 %v952, %v953
        %v955 = vrot.slane %v954, 2
        %v956 = vadd.f32 %v954, %v955
        %v957 = vrot.slane %v956, 1
        %v958 = vadd.f32 %v956, %v957
        %s959 = vtos %v958
        %s960 = smul.f32 %s959, 0.00048828125
        %v961 = vmul.f32 %v835, %v835
        %v962 = vmul.f32 %v854, %v854
        %v963 = vadd.f32 %v961, %v962
        %964 = vadd.xlane.f32.xlu0 %v963
        %v965 = vpop.xlane.xlu0 %964
        %v966 = vrot.slane %v965, 4
        %v967 = vadd.f32 %v965, %v966
        %v968 = vrot.slane %v967, 2
        %v969 = vadd.f32 %v967, %v968
        %v970 = vrot.slane %v969, 1
        %v971 = vadd.f32 %v969, %v970
        %s972 = vtos %v971
        %s973 = smul.f32 %s972, 0.00048828125
        %s974 = smul.f32 %s960, %s960
        %s975 = ssub.f32 %s973, %s974
        %s976 = smax.f32 %s975, 0.0
        %v977 = vstv %s960
        %v978 = vsub.f32 %v835, %v977
        %v979 = vsub.f32 %v854, %v977
        %s980 = sadd.f32 %s976, 1e-05
        %v981 = vstv %s980
        %v982 = vrsqrt.pop %v981
        %v983 = vmul.f32 %v982, %v981
        %v984 = vmul.f32 %v983, %v982
        %v985 = vmul.f32 0.5, %v984
        %v986 = vsub.f32 1.5, %v985
        %v987 = vmul.f32 %v982, %v986
        %vm988 = vweird.f32 %v981
        %vm989 = vweird.f32 %v982
        %vm990 = vmor %vm988, %vm989
        %v991 = vsel %vm990, %v982, %v987
        %s992 = vtos %v991
        %v993 = vstv %s992
        %v994 = vmul.f32 %v978, %v993
        %v995 = vmul.f32 %v979, %v993
        %v996 = vadd.f32 %v837, %v856
        %997 = vadd.xlane.f32.xlu0 %v996
        %v998 = vpop.xlane.xlu0 %997
        %v999 = vrot.slane %v998, 4
        %v1000 = vadd.f32 %v998, %v999
        %v1001 = vrot.slane %v1000, 2
        %v1002 = vadd.f32 %v1000, %v1001
        %v1003 = vrot.slane %v1002, 1
        %v1004 = vadd.f32 %v1002, %v1003
        %s1005 = vtos %v1004
        %s1006 = smul.f32 %s1005, 0.00048828125
        %v1007 = vmul.f32 %v837, %v837
        %v1008 = vmul.f32 %v856, %v856
        %v1009 = vadd.f32 %v1007, %v1008
        %1010 = vadd.xlane.f32.xlu0 %v1009
        %v1011 = vpop.xlane.xlu0 %1010
        %v1012 = vrot.slane %v1011, 4
        %v1013 = vadd.f32 %v1011, %v1012
        %v1014 = vrot.slane %v1013, 2
        %v1015 = vadd.f32 %v1013, %v1014
        %v1016 = vrot.slane %v1015, 1
        %v1017 = vadd.f32 %v1015, %v1016
        %s1018 = vtos %v1017
        %s1019 = smul.f32 %s1018, 0.00048828125
        %s1020 = smul.f32 %s1006, %s1006
        %s1021 = ssub.f32 %s1019, %s1020
        %s1022 = smax.f32 %s1021, 0.0
        %v1023 = vstv %s1006
        %v1024 = vsub.f32 %v837, %v1023
        %v1025 = vsub.f32 %v856, %v1023
        %s1026 = sadd.f32 %s1022, 1e-05
        %v1027 = vstv %s1026
        %v1028 = vrsqrt.pop %v1027
        %v1029 = vmul.f32 %v1028, %v1027
        %v1030 = vmul.f32 %v1029, %v1028
        %v1031 = vmul.f32 0.5, %v1030
        %v1032 = vsub.f32 1.5, %v1031
        %v1033 = vmul.f32 %v1028, %v1032
        %vm1034 = vweird.f32 %v1027
        %vm1035 = vweird.f32 %v1028
        %vm1036 = vmor %vm1034, %vm1035
        %v1037 = vsel %vm1036, %v1028, %v1033
        %s1038 = vtos %v1037
        %v1039 = vstv %s1038
        %v1040 = vmul.f32 %v1024, %v1039
        %v1041 = vmul.f32 %v1025, %v1039
        %1042 = vset.pattern.permute.xlu0 1
        %1043 = vperm.xlu0 %1042, %v769
        %v1044 = vpop.permute.xlu0 %1043
        %1046 = vset.pattern.permute.xlu0 1
        %1047 = vperm.xlu0 %1046, %v770
        %v1048 = vpop.permute.xlu0 %1047
        %1050 = vset.pattern.permute.xlu0 1
        %1051 = vperm.xlu0 %1050, %v771
        %v1052 = vpop.permute.xlu0 %1051
        %1054 = vset.pattern.permute.xlu0 1
        %1055 = vperm.xlu0 %1054, %v772
        %v1056 = vpop.permute.xlu0 %1055
        %v1058 = vmul.f32 %v902, %v1044
        %v1059 = vmul.f32 %v903, %v1044
        %v1060 = vmul.f32 %v948, %v1048
        %v1061 = vmul.f32 %v949, %v1048
        %v1062 = vmul.f32 %v994, %v1052
        %v1063 = vmul.f32 %v995, %v1052
        %v1064 = vmul.f32 %v1040, %v1056
        %v1065 = vmul.f32 %v1041, %v1056
        %1066 = vset.pattern.permute.xlu0 2
        %1067 = vperm.xlu0 %1066, %v769
        %v1068 = vpop.permute.xlu0 %1067
        %1070 = vset.pattern.permute.xlu0 2
        %1071 = vperm.xlu0 %1070, %v770
        %v1072 = vpop.permute.xlu0 %1071
        %1074 = vset.pattern.permute.xlu0 2
        %1075 = vperm.xlu0 %1074, %v771
        %v1076 = vpop.permute.xlu0 %1075
        %1078 = vset.pattern.permute.xlu0 2
        %1079 = vperm.xlu0 %1078, %v772
        %v1080 = vpop.permute.xlu0 %1079
        %v1082 = vadd.f32 %v1058, %v1068
        %v1083 = vadd.f32 %v1059, %v1068
        %v1084 = vadd.f32 %v1060, %v1072
        %v1085 = vadd.f32 %v1061, %v1072
        %v1086 = vadd.f32 %v1062, %v1076
        %v1087 = vadd.f32 %v1063, %v1076
        %v1088 = vadd.f32 %v1064, %v1080
        %v1089 = vadd.f32 %v1065, %v1080
        %v1090 = vmax.f32 %v1082, 0.0
        %v1091 = vmax.f32 %v1083, 0.0
        %v1092 = vmax.f32 %v1084, 0.0
        %v1093 = vmax.f32 %v1085, 0.0
        %v1094 = vmax.f32 %v1086, 0.0
        %v1095 = vmax.f32 %v1087, 0.0
        %v1096 = vmax.f32 %v1088, 0.0
        %v1097 = vmax.f32 %v1089, 0.0
        %1098 = vst [vmem:[%s214] sm:$0xff] %v1090
        %1099 = vst [vmem:[%s214 + $0x8] sm:$0xff] %v1091
        %1100 = vst [vmem:[%s214 + $0x10] sm:$0xff] %v1092
        %1101 = vst [vmem:[%s214 + $0x18] sm:$0xff] %v1093
        %1102 = vst [vmem:[%s214 + $0x20] sm:$0xff] %v1094
        %1103 = vst [vmem:[%s214 + $0x28] sm:$0xff] %v1095
        %1104 = vst [vmem:[%s214 + $0x30] sm:$0xff] %v1096
        %1105 = vst [vmem:[%s214 + $0x38] sm:$0xff] %v1097
        %s1106 = sand.u32 %s134, 1
        %s1107 = sand.u32 %s134, 1
        %s1108 = smul.addr %s1107, 64
        %s1109 = scalar_lea.vmem [#allocation2], %s1108
        // Predicated region
        $region41: #{fire_pallas.1} parent=39 // pred_check
          %p1110 = pneg %p144
        $region42: #{fire_pallas.1} parent=39 // pred_check_branch
          %1112 = sbr.rel (%p1110) target = $region44
        $region43: #{fire_pallas.1} parent=39 // pred_region
          %s1113 = smul.u32 2, %s16
          %s1114 = smul.addr %s1113, 8
          %s1115 = scalar_lea.vmem %s5, %s1114
          // Predicated region
          $region45: #{fire_pallas.1} parent=43 // pred_check
            _
          $region46: #{fire_pallas.1} parent=43 // pred_check_branch
            %1117 = sbr.rel (0) target = $region48
          $region47: #{fire_pallas.1} parent=43 // pred_region
            // Predicated region
            $region49: #{fire_pallas.1} parent=47 // pred_check
              _
            $region50: #{fire_pallas.1} parent=47 // pred_check_branch
              %1119 = sbr.rel (0) target = $region52
            $region51: #{fire_pallas.1} parent=47 // pred_region
              loop: start=0, step=1, limit=1
              $region53: #{fire_pallas.1} parent=51 // loop_pre_header
                _
              $region54: #{fire_pallas.1} parent=51 // loop_header
                %s1121 = sphi 0, %s1125
                %p1122 = scmp.ge.s32.totalorder %s1121, 1
                %s1126 = sphi %s1109, %s1109
                %s1127 = sphi %s1115, %s1115
              $region55: #{fire_pallas.1} parent=51 // loop_header_branch
                %1124 = sbr.rel (%p1122) target = $region59
              $region56: #{fire_pallas.1} parent=51 // loop_body
                %v1128 = vld [vmem:[%s1126] sm:$0xff]
                %1129 = vst [vmem:[%s1127] sm:$0xff] %v1128
                %v1130 = vld [vmem:[%s1126 + $0x8] sm:$0xff]
                %1131 = vst [vmem:[%s1127 + $0x8] sm:$0xff] %v1130
                %v1132 = vld [vmem:[%s1126 + $0x10] sm:$0xff]
                %1133 = vst [vmem:[%s1127 + $0x20] sm:$0xff] %v1132
                %v1134 = vld [vmem:[%s1126 + $0x18] sm:$0xff]
                %1135 = vst [vmem:[%s1127 + $0x28] sm:$0xff] %v1134
                %v1136 = vld [vmem:[%s1126 + $0x20] sm:$0xff]
                %1137 = vst [vmem:[%s1127 + $0x40] sm:$0xff] %v1136
                %v1138 = vld [vmem:[%s1126 + $0x28] sm:$0xff]
                %1139 = vst [vmem:[%s1127 + $0x48] sm:$0xff] %v1138
                %v1140 = vld [vmem:[%s1126 + $0x30] sm:$0xff]
                %1141 = vst [vmem:[%s1127 + $0x60] sm:$0xff] %v1140
                %v1142 = vld [vmem:[%s1126 + $0x38] sm:$0xff]
                %1143 = vst [vmem:[%s1127 + $0x68] sm:$0xff] %v1142
              $region57: #{fire_pallas.1} parent=51 // loop_footer
                %s1125 = sadd.s32 1, %s1121
              $region58: #{fire_pallas.1} parent=51 // loop_footer_branch
                %1120 = sbr.rel target = $region54
              $region59: #{fire_pallas.1} parent=51 // loop_exit
                _
            $region52: #{fire_pallas.1} parent=47 // pred_fallthru
              _
            // Predicated region
            $region60: #{fire_pallas.1} parent=47 // pred_check
              _
            $region61: #{fire_pallas.1} parent=47 // pred_check_branch
              %1145 = sbr.rel target = $region63
            $region62: #{fire_pallas.1} parent=47 // pred_region
              _
            $region63: #{fire_pallas.1} parent=47 // pred_fallthru
              _
          $region48: #{fire_pallas.1} parent=43 // pred_fallthru
            _
          %1146 = vnop
        $region44: #{fire_pallas.1} parent=39 // pred_fallthru
          _
      $region40: #{fire_pallas.1} parent=5 // pred_fallthru
        _
      %p1147 = scmp.le.s32.totalorder 2, %s11
      // Predicated region
      $region64: #{fire_pallas.1} parent=5 // pred_check
        %p1148 = pneg %p1147
      $region65: #{fire_pallas.1} parent=5 // pred_check_branch
        %1150 = sbr.rel (%p1148) target = $region67
      $region66: #{fire_pallas.1} parent=5 // pred_region
        %s1151 = ssub.s32 %s11, 2
        // Predicated region
        $region68: #{fire_pallas.1} parent=66 // pred_check
          %p1152 = pneg %p150
        $region69: #{fire_pallas.1} parent=66 // pred_check_branch
          %1154 = sbr.rel (%p1152) target = $region71
        $region70: #{fire_pallas.1} parent=66 // pred_region
          %s1155 = sand.u32 %s135, 1
          %s1156 = sand.u32 %s135, 1
          %s1157 = smul.addr %s1156, 64
          %s1158 = scalar_lea.vmem [#allocation2], %s1157
        $region71: #{fire_pallas.1} parent=66 // pred_fallthru
          _
      $region67: #{fire_pallas.1} parent=5 // pred_fallthru
        _
    $region6: #{fire_pallas.1} parent=1 // loop_footer
      %s15 = sadd.s32 1, %s11
    $region7: #{fire_pallas.1} parent=1 // loop_footer_branch
      %10 = sbr.rel target = $region3
    $region8: #{fire_pallas.1} parent=1 // loop_exit
      _

</llo_original>
